<compile_context>
chip_gen: v7x
topology: tpu7x:2x2x1
jax: 0.10.0
libtpu: 0.0.40
codegen_flags: <defaults>
</compile_context>

<pallas_src>
import functools
import math

import jax
import jax.numpy as jnp
from jax import lax
from jax.experimental import pallas as pl
from jax.experimental.pallas import tpu as pltpu


_MIB = 1024 * 1024


def _tpu_vmem_capacity_bytes():
    """Physical VMEM per TensorCore; conservative fallback if unqueryable."""
    try:
        return int(pltpu.get_tpu_info().vmem_capacity_bytes)
    except Exception:
        return 64 * _MIB          # v7x-sized minimum: safe on every generation


def _pick_tile(n, max_tile):
    """Largest power-of-two tile <= max_tile dividing n, else n (small-N fallback)."""
    for t in (1024, 512, 256, 128):
        if t <= max_tile and n % t == 0:
            return t
    # TODO(synk): pad N / add a masked tail path for large non-divisible H*W
    # (e.g. 14x14 feature maps) instead of an un-tiled full-N block.
    return n


# --------------------------------------------------------------------------
# Kernel 1: fused K/V projection, channels-first.
# --------------------------------------------------------------------------
def _kv_proj_kernel(x_ref, wkv_ref, bkv_ref, k_ref, v_ref):
    """x: (1, Cp, tn); wkv: (2Cp, Cp); bkv: (2Cp, 1); k/v out: (1, Cp, tn)."""
    x = x_ref[0].astype(jnp.bfloat16)
    w = wkv_ref[...].astype(jnp.bfloat16)
    kv = jnp.dot(w, x, preferred_element_type=jnp.float32) + bkv_ref[...]
    c = k_ref.shape[1]
    k_ref[0] = kv[:c, :]
    v_ref[0] = kv[c:, :]


# --------------------------------------------------------------------------
# Kernel 2: flash-tiled attention + fused Q projection + gamma residual.
# --------------------------------------------------------------------------
def _flash_attn_kernel(x_ref, wq_ref, bq_ref, k_ref, v_ref, gamma_ref, o_ref,
                       q_sc, m_sc, l_sc, acc_sc, *, scale):
    """One (batch, query-block, kv-block) grid step.

    x_ref : (1, Cp, tq)  residual tile (also the input of the Q projection)
    wq/bq : (Cp, Cp) / (Cp, 1) resident projection weights
    k_ref : (1, Cp, tk), v_ref : (1, Cp, tk)
    gamma : (1,) SMEM scalar
    o_ref : (1, Cp, tq)  (same block across the kv axis -> accumulator output)
    q_sc  : (Cp, tq) bf16;  m_sc/l_sc : (1, tq) f32;  acc_sc : (Cp, tq) f32
    """
    ki = pl.program_id(2)

    @pl.when(ki == 0)
    def _():
        # Q projection fused here: one (Cp,Cp)x(Cp,tq) matmul per query tile,
        # pre-scaled by C**-0.5 and stored in bf16 for the score matmuls.
        xq = x_ref[0].astype(jnp.bfloat16)
        q = jnp.dot(wq_ref[...].astype(jnp.bfloat16), xq,
                    preferred_element_type=jnp.float32) + bq_ref[...]
        q_sc[...] = (q * scale).astype(jnp.bfloat16)
        m_sc[...] = jnp.full(m_sc.shape, -jnp.inf, jnp.float32)
        l_sc[...] = jnp.zeros(l_sc.shape, jnp.float32)
        acc_sc[...] = jnp.zeros(acc_sc.shape, jnp.float32)

    k = k_ref[0].astype(jnp.bfloat16)              # (Cp, tk)
    v = v_ref[0].astype(jnp.bfloat16)              # (Cp, tk)

    # Transposed scores: s_t[m, n] = sum_c k[c, m] * q_scaled[c, n] -> (tk, tq)
    s_t = lax.dot_general(k, q_sc[...], (((0,), (0,)), ((), ())),
                          preferred_element_type=jnp.float32)

    m_prev = m_sc[...]                                            # (1, tq)
    m_new = jnp.maximum(m_prev, jnp.max(s_t, axis=0, keepdims=True))
    alpha = jnp.exp(m_prev - m_new)                               # (1, tq)
    p = jnp.exp(s_t - m_new)                                      # (tk, tq) f32
    l_sc[...] = alpha * l_sc[...] + jnp.sum(p, axis=0, keepdims=True)
    acc_sc[...] = alpha * acc_sc[...] + jnp.dot(
        v, p.astype(jnp.bfloat16), preferred_element_type=jnp.float32)
    m_sc[...] = m_new

    @pl.when(ki == pl.num_programs(2) - 1)
    def _():
        out = acc_sc[...] / l_sc[...]       # exact divide (once per query tile)
        o_ref[0] = gamma_ref[0] * out + x_ref[0]


# --------------------------------------------------------------------------
# Wrapper
# --------------------------------------------------------------------------
def self_attention_pallas(x_nchw, wq, bq, wk, bk, wv, bv, gamma,
                          *, tn=None, tq=None, tk=None):
    """x_nchw: (B, C, H, W) float32. Returns (B, C, H, W).

    Implements the context=None (self-attention) path of the PyTorch module.
    """
    B, C, H, W = x_nchw.shape
    N = H * W
    scale = float(C) ** (-0.5)

    # ---- generation-aware budgets ------------------------------------------
    vmem_cap = _tpu_vmem_capacity_bytes()
    vmem_limit = min(int(vmem_cap * 3 // 4), 100 * _MIB)   # ~48 MiB v7x, ~96 MiB v5e/v6e
    max_tile = 512 if vmem_cap <= 64 * _MIB else 1024

    # ---- channel padding to a sublane multiple (zero-padded: math unchanged)
    Cp = max(8, -(-C // 8) * 8)
    pc = Cp - C

    def _pad_w(w):   # (C, C) -> (Cp, Cp)
        return jnp.pad(jnp.asarray(w, jnp.float32), ((0, pc), (0, pc)))

    def _pad_b(b):   # (C,) -> (Cp, 1)
        return jnp.pad(jnp.asarray(b, jnp.float32), (0, pc)).reshape(Cp, 1)

    # Channels-first tokens: same memory layout as x.view(B, C, H*W); no transpose.
    x_cf = jnp.asarray(x_nchw, jnp.float32).reshape(B, C, N)
    if pc:
        x_cf = jnp.pad(x_cf, ((0, 0), (0, pc), (0, 0)))

    wq_p, bq_p = _pad_w(wq), _pad_b(bq)
    wkv = jnp.concatenate([_pad_w(wk), _pad_w(wv)], axis=0)        # (2Cp, Cp)
    bkv = jnp.concatenate([_pad_b(bk), _pad_b(bv)], axis=0)        # (2Cp, 1)
    gamma1 = jnp.asarray(gamma, jnp.float32).reshape(1)

    tn = _pick_tile(N, max_tile) if tn is None else tn
    tq = _pick_tile(N, max_tile) if tq is None else tq
    tk = _pick_tile(N, max_tile) if tk is None else tk
    assert N % tn == 0 and N % tq == 0 and N % tk == 0, "tiles must divide H*W"

    # ---- kernel 1: fused K/V projection ------------------------------------
    proj_cost = pl.CostEstimate(
        flops=2 * B * (2 * Cp) * Cp * N,
        transcendentals=0,
        bytes_accessed=4 * (3 * B * Cp * N + 2 * Cp * Cp + 2 * Cp))
    k_cf, v_cf = pl.pallas_call(
        _kv_proj_kernel,
        out_shape=(jax.ShapeDtypeStruct((B, Cp, N), jnp.float32),) * 2,
        grid_spec=pltpu.PrefetchScalarGridSpec(
            num_scalar_prefetch=0,
            grid=(B, N // tn),
            in_specs=[
                pl.BlockSpec((1, Cp, tn), lambda b, n: (b, 0, n)),   # x tile
                pl.BlockSpec((2 * Cp, Cp), lambda b, n: (0, 0)),     # fused Wk|Wv
                pl.BlockSpec((2 * Cp, 1), lambda b, n: (0, 0)),      # fused bias
            ],
            out_specs=[
                pl.BlockSpec((1, Cp, tn), lambda b, n: (b, 0, n)),
                pl.BlockSpec((1, Cp, tn), lambda b, n: (b, 0, n)),
            ]),
        compiler_params=pltpu.CompilerParams(
            dimension_semantics=("parallel", "parallel"),
            vmem_limit_bytes=vmem_limit),
        cost_estimate=proj_cost,
    )(x_cf, wkv, bkv)

    # ---- kernel 2: flash attention (+ fused Q projection, gamma residual) --
    attn_cost = pl.CostEstimate(
        flops=B * (2 * Cp * Cp * N + 4 * N * N * Cp),
        transcendentals=B * N * N,
        bytes_accessed=4 * (2 * B * Cp * N + 2 * B * Cp * N * (N // tq) + Cp * Cp))
    out_cf = pl.pallas_call(
        functools.partial(_flash_attn_kernel, scale=scale),
        out_shape=jax.ShapeDtypeStruct((B, Cp, N), jnp.float32),
        grid_spec=pltpu.PrefetchScalarGridSpec(
            num_scalar_prefetch=0,
            grid=(B, N // tq, N // tk),
            in_specs=[
                pl.BlockSpec((1, Cp, tq), lambda b, qi, ki: (b, 0, qi)),  # x (residual + Q input)
                pl.BlockSpec((Cp, Cp), lambda b, qi, ki: (0, 0)),         # Wq (resident)
                pl.BlockSpec((Cp, 1), lambda b, qi, ki: (0, 0)),          # bq
                pl.BlockSpec((1, Cp, tk), lambda b, qi, ki: (b, 0, ki)),  # K
                pl.BlockSpec((1, Cp, tk), lambda b, qi, ki: (b, 0, ki)),  # V
                pl.BlockSpec(memory_space=pltpu.SMEM),                    # gamma scalar
            ],
            out_specs=pl.BlockSpec((1, Cp, tq), lambda b, qi, ki: (b, 0, qi)),
            scratch_shapes=[
                pltpu.VMEM((Cp, tq), jnp.bfloat16),   # pre-scaled Q tile
                pltpu.VMEM((1, tq), jnp.float32),     # running max m
                pltpu.VMEM((1, tq), jnp.float32),     # running denom l
                pltpu.VMEM((Cp, tq), jnp.float32),    # output accumulator
            ]),
        compiler_params=pltpu.CompilerParams(
            dimension_semantics=("parallel", "parallel", "arbitrary"),
            vmem_limit_bytes=vmem_limit),
        cost_estimate=attn_cost,
        input_output_aliases={0: 0},      # reuse the residual buffer for the output
    )(x_cf, wq_p, bq_p, k_cf, v_cf, gamma1)

    out = out_cf[:, :C, :] if pc else out_cf
    return out.reshape(B, C, H, W)


# --------------------------------------------------------------------------
# Pure-JAX reference mirroring the PyTorch forward.
# --------------------------------------------------------------------------
def self_attention_ref(x_nchw, wq, bq, wk, bk, wv, bv, gamma):
    B, C, H, W = x_nchw.shape
    N = H * W
    xf = jnp.transpose(x_nchw.reshape(B, C, N), (0, 2, 1))     # (B, N, C)
    q = xf @ wq.T + bq
    k = xf @ wk.T + bk
    v = xf @ wv.T + bv
    attn = jnp.einsum("bnc,bmc->bnm", q, k) * (C ** (-0.5))
    attn = jax.nn.softmax(attn, axis=-1)
    out = jnp.einsum("bnm,bmc->bnc", attn, v)                  # (B, N, C)
    out = jnp.transpose(out, (0, 2, 1)).reshape(B, C, H, W)
    return gamma * out + x_nchw


if __name__ == "__main__":
    B, C, H, W = 2, 4, 16, 16

    key = jax.random.PRNGKey(0)
    kx, kq, kbq, kk, kbk, kv, kbv = jax.random.split(key, 7)

    x = jax.random.normal(kx, (B, C, H, W), jnp.float32)

    # Parameter shapes from nn.Linear(channels, channels).
    bound = 1.0 / math.sqrt(C)
    wq = jax.random.uniform(kq, (C, C), jnp.float32, -bound, bound)
    bq = jax.random.uniform(kbq, (C,), jnp.float32, -bound, bound)
    wk = jax.random.uniform(kk, (C, C), jnp.float32, -bound, bound)
    bk = jax.random.uniform(kbk, (C,), jnp.float32, -bound, bound)
    wv = jax.random.uniform(kv, (C, C), jnp.float32, -bound, bound)
    bv = jax.random.uniform(kbv, (C,), jnp.float32, -bound, bound)
    gamma = jnp.float32(1.0)

    # Small tiles here only so the tiny test exercises the multi-block flash
    # path (N = 256 -> attention grid (2, 2, 2), projection grid (2, 2)).
    # Production leaves tn/tq/tk=None so the generation-aware selector picks
    # 256/512/1024-wide tiles.
    fwd = jax.jit(functools.partial(self_attention_pallas, tn=128, tq=128, tk=128))
    out = jax.block_until_ready(fwd(x, wq, bq, wk, bk, wv, bv, gamma))

    ref = self_attention_ref(x, wq, bq, wk, bk, wv, bv, gamma)
    assert out.shape == (B, C, H, W)
    # bf16 MXU inputs (with f32 accumulation and f32 softmax state) -> relaxed
    # tolerance vs. the pure-f32 reference.
    assert jnp.allclose(out, ref, atol=2e-2, rtol=2e-2), "mismatch vs reference"

    print("KERNEL_OK")
</pallas_src>

<mosaic_0001>
module attributes {stable_mosaic.version = 11 : i64} {
  func.func @_kv_proj_kernel(%arg0: i32, %arg1: i32, %arg2: memref<1x8x128xf32, #tpu.memory_space<vmem>>, %arg3: memref<16x8xf32, #tpu.memory_space<vmem>>, %arg4: memref<16x1xf32, #tpu.memory_space<vmem>>, %arg5: memref<1x8x128xf32, #tpu.memory_space<vmem>>, %arg6: memref<1x8x128xf32, #tpu.memory_space<vmem>>) attributes {dimension_semantics = [#tpu.dimension_semantics<parallel>, #tpu.dimension_semantics<parallel>], iteration_bounds = array<i64: 2, 2>, scalar_prefetch = 0 : i64, scratch_operands = 0 : i64, tpu.core_type = #tpu.core_type<tc>, window_params = [{transform_indices = @transform_0, window_bounds = array<i64: 1, 8, 128>}, {pipeline_mode = #tpu.pipeline_mode<synchronous>, transform_indices = @transform_1, window_bounds = array<i64: 16, 8>}, {pipeline_mode = #tpu.pipeline_mode<synchronous>, transform_indices = @transform_2, window_bounds = array<i64: 16, 1>}, {transform_indices = @transform_3, window_bounds = array<i64: 1, 8, 128>}, {transform_indices = @transform_4, window_bounds = array<i64: 1, 8, 128>}]} {
    %c0 = arith.constant 0 : index
    %c0_0 = arith.constant 0 : index
    %c0_1 = arith.constant 0 : index
    %0 = vector.load %arg2[%c0, %c0_0, %c0_1] : memref<1x8x128xf32, #tpu.memory_space<vmem>>, vector<1x8x128xf32>
    %1 = vector.shape_cast %0 : vector<1x8x128xf32> to vector<8x128xf32>
    %2 = arith.truncf %1 : vector<8x128xf32> to vector<8x128xbf16>
    %c0_2 = arith.constant 0 : index
    %c0_3 = arith.constant 0 : index
    %3 = vector.load %arg3[%c0_2, %c0_3] : memref<16x8xf32, #tpu.memory_space<vmem>>, vector<16x8xf32>
    %4 = arith.truncf %3 : vector<16x8xf32> to vector<16x8xbf16>
    %cst = arith.constant dense<0.000000e+00> : vector<16x128xf32>
    %5 = tpu.matmul %4, %2, %cst {dimension_numbers = #tpu.dot_dimension_numbers<[1], [0], [0], [1], [0, 0, 1, 1], [], []>} : vector<16x8xbf16>, vector<8x128xbf16>, vector<16x128xf32> -> vector<16x128xf32>
    %c0_4 = arith.constant 0 : index
    %c0_5 = arith.constant 0 : index
    %6 = vector.load %arg4[%c0_4, %c0_5] : memref<16x1xf32, #tpu.memory_space<vmem>>, vector<16x1xf32>
    %7 = vector.broadcast %6 : vector<16x1xf32> to vector<16x128xf32>
    %8 = arith.addf %5, %7 : vector<16x128xf32>
    %9 = vector.extract_strided_slice %8 {offsets = [0, 0], sizes = [8, 128], strides = [1, 1]} : vector<16x128xf32> to vector<8x128xf32>
    %c0_6 = arith.constant 0 : index
    %c0_7 = arith.constant 0 : index
    %c0_8 = arith.constant 0 : index
    %10 = vector.load %arg5[%c0_6, %c0_7, %c0_8] : memref<1x8x128xf32, #tpu.memory_space<vmem>>, vector<1x8x128xf32>
    %11 = vector.shape_cast %10 : vector<1x8x128xf32> to vector<8x128xf32>
    %12 = vector.shape_cast %9 : vector<8x128xf32> to vector<1x8x128xf32>
    tpu.vector_store %arg5[%c0_6, %c0_7, %c0_8], %12 {strides = array<i32>} : memref<1x8x128xf32, #tpu.memory_space<vmem>>, vector<1x8x128xf32>,
    %13 = vector.extract_strided_slice %8 {offsets = [8, 0], sizes = [8, 128], strides = [1, 1]} : vector<16x128xf32> to vector<8x128xf32>
    %c0_9 = arith.constant 0 : index
    %c0_10 = arith.constant 0 : index
    %c0_11 = arith.constant 0 : index
    %14 = vector.load %arg6[%c0_9, %c0_10, %c0_11] : memref<1x8x128xf32, #tpu.memory_space<vmem>>, vector<1x8x128xf32>
    %15 = vector.shape_cast %14 : vector<1x8x128xf32> to vector<8x128xf32>
    %16 = vector.shape_cast %13 : vector<8x128xf32> to vector<1x8x128xf32>
    tpu.vector_store %arg6[%c0_9, %c0_10, %c0_11], %16 {strides = array<i32>} : memref<1x8x128xf32, #tpu.memory_space<vmem>>, vector<1x8x128xf32>,
    return
  }
  func.func @transform_0(%arg0: i32, %arg1: i32) -> (i32, i32, i32) {
    %c0_i32 = arith.constant 0 : i32
    %c0_i32_0 = arith.constant 0 : i32
    return %arg0, %c0_i32, %arg1 : i32, i32, i32
  }
  func.func @transform_1(%arg0: i32, %arg1: i32) -> (i32, i32) {
    %c0_i32 = arith.constant 0 : i32
    %c0_i32_0 = arith.constant 0 : i32
    %c0_i32_1 = arith.constant 0 : i32
    return %c0_i32, %c0_i32_0 : i32, i32
  }
  func.func @transform_2(%arg0: i32, %arg1: i32) -> (i32, i32) {
    %c0_i32 = arith.constant 0 : i32
    %c0_i32_0 = arith.constant 0 : i32
    %c0_i32_1 = arith.constant 0 : i32
    return %c0_i32, %c0_i32_0 : i32, i32
  }
  func.func @transform_3(%arg0: i32, %arg1: i32) -> (i32, i32, i32) {
    %c0_i32 = arith.constant 0 : i32
    %c0_i32_0 = arith.constant 0 : i32
    return %arg0, %c0_i32, %arg1 : i32, i32, i32
  }
  func.func @transform_4(%arg0: i32, %arg1: i32) -> (i32, i32, i32) {
    %c0_i32 = arith.constant 0 : i32
    %c0_i32_0 = arith.constant 0 : i32
    return %arg0, %c0_i32, %arg1 : i32, i32, i32
  }
}

module attributes {stable_mosaic.version = 11 : i64} {
  func.func @_flash_attn_kernel(%arg0: i32, %arg1: i32, %arg2: i32, %arg3: memref<1x8x128xf32, #tpu.memory_space<vmem>>, %arg4: memref<8x8xf32, #tpu.memory_space<vmem>>, %arg5: memref<8x1xf32, #tpu.memory_space<vmem>>, %arg6: memref<1x8x128xf32, #tpu.memory_space<vmem>>, %arg7: memref<1x8x128xf32, #tpu.memory_space<vmem>>, %arg8: memref<1xf32, #tpu.memory_space<smem>>, %arg9: memref<1x8x128xf32, #tpu.memory_space<vmem>>, %arg10: memref<8x128xbf16, #tpu.memory_space<vmem>>, %arg11: memref<1x128xf32, #tpu.memory_space<vmem>>, %arg12: memref<1x128xf32, #tpu.memory_space<vmem>>, %arg13: memref<8x128xf32, #tpu.memory_space<vmem>>) attributes {dimension_semantics = [#tpu.dimension_semantics<parallel>, #tpu.dimension_semantics<parallel>, #tpu.dimension_semantics<arbitrary>], iteration_bounds = array<i64: 2, 2, 2>, scalar_prefetch = 0 : i64, scratch_operands = 4 : i64, tpu.core_type = #tpu.core_type<tc>, window_params = [{transform_indices = @transform_0, window_bounds = array<i64: 1, 8, 128>}, {pipeline_mode = #tpu.pipeline_mode<synchronous>, transform_indices = @transform_1, window_bounds = array<i64: 8, 8>}, {pipeline_mode = #tpu.pipeline_mode<synchronous>, transform_indices = @transform_2, window_bounds = array<i64: 8, 1>}, {transform_indices = @transform_3, window_bounds = array<i64: 1, 8, 128>}, {transform_indices = @transform_4, window_bounds = array<i64: 1, 8, 128>}, {transform_indices = @transform_5, window_bounds = array<i64: 1>}, {transform_indices = @transform_6, window_bounds = array<i64: 1, 8, 128>}]} {
    %c0_i32 = arith.constant 0 : i32
    %0 = arith.cmpi eq, %arg2, %c0_i32 : i32
    %1 = arith.extui %0 : i1 to i32
    %c0_i32_0 = arith.constant 0 : i32
    %2 = arith.cmpi ne, %1, %c0_i32_0 : i32
    scf.if %2 {
      %c0_24 = arith.constant 0 : index
      %c0_25 = arith.constant 0 : index
      %c0_26 = arith.constant 0 : index
      %37 = vector.load %arg3[%c0_24, %c0_25, %c0_26] : memref<1x8x128xf32, #tpu.memory_space<vmem>>, vector<1x8x128xf32>
      %38 = vector.shape_cast %37 : vector<1x8x128xf32> to vector<8x128xf32>
      %39 = arith.truncf %38 : vector<8x128xf32> to vector<8x128xbf16>
      %c0_27 = arith.constant 0 : index
      %c0_28 = arith.constant 0 : index
      %40 = vector.load %arg4[%c0_27, %c0_28] : memref<8x8xf32, #tpu.memory_space<vmem>>, vector<8x8xf32>
      %41 = arith.truncf %40 : vector<8x8xf32> to vector<8x8xbf16>
      %cst_29 = arith.constant dense<0.000000e+00> : vector<8x128xf32>
      %42 = tpu.matmul %41, %39, %cst_29 {dimension_numbers = #tpu.dot_dimension_numbers<[1], [0], [0], [1], [0, 0, 1, 1], [], []>} : vector<8x8xbf16>, vector<8x128xbf16>, vector<8x128xf32> -> vector<8x128xf32>
      %c0_30 = arith.constant 0 : index
      %c0_31 = arith.constant 0 : index
      %43 = vector.load %arg5[%c0_30, %c0_31] : memref<8x1xf32, #tpu.memory_space<vmem>>, vector<8x1xf32>
      %44 = vector.broadcast %43 : vector<8x1xf32> to vector<8x128xf32>
      %45 = arith.addf %42, %44 : vector<8x128xf32>
      %cst_32 = arith.constant 5.000000e-01 : f32
      %46 = vector.broadcast %cst_32 : f32 to vector<8x128xf32>
      %47 = arith.mulf %45, %46 : vector<8x128xf32>
      %48 = arith.truncf %47 : vector<8x128xf32> to vector<8x128xbf16>
      %c0_33 = arith.constant 0 : index
      %c0_34 = arith.constant 0 : index
      %49 = vector.load %arg10[%c0_33, %c0_34] : memref<8x128xbf16, #tpu.memory_space<vmem>>, vector<8x128xbf16>
      tpu.vector_store %arg10[%c0_33, %c0_34], %48 {strides = array<i32>} : memref<8x128xbf16, #tpu.memory_space<vmem>>, vector<8x128xbf16>,
      %cst_35 = arith.constant 0xFF800000 : f32
      %50 = vector.broadcast %cst_35 : f32 to vector<1x128xf32>
      %c0_36 = arith.constant 0 : index
      %c0_37 = arith.constant 0 : index
      %51 = vector.load %arg11[%c0_36, %c0_37] : memref<1x128xf32, #tpu.memory_space<vmem>>, vector<1x128xf32>
      tpu.vector_store %arg11[%c0_36, %c0_37], %50 {strides = array<i32>} : memref<1x128xf32, #tpu.memory_space<vmem>>, vector<1x128xf32>,
      %cst_38 = arith.constant 0.000000e+00 : f32
      %52 = vector.broadcast %cst_38 : f32 to vector<1x128xf32>
      %c0_39 = arith.constant 0 : index
      %c0_40 = arith.constant 0 : index
      %53 = vector.load %arg12[%c0_39, %c0_40] : memref<1x128xf32, #tpu.memory_space<vmem>>, vector<1x128xf32>
      tpu.vector_store %arg12[%c0_39, %c0_40], %52 {strides = array<i32>} : memref<1x128xf32, #tpu.memory_space<vmem>>, vector<1x128xf32>,
      %cst_41 = arith.constant 0.000000e+00 : f32
      %54 = vector.broadcast %cst_41 : f32 to vector<8x128xf32>
      %c0_42 = arith.constant 0 : index
      %c0_43 = arith.constant 0 : index
      %55 = vector.load %arg13[%c0_42, %c0_43] : memref<8x128xf32, #tpu.memory_space<vmem>>, vector<8x128xf32>
      tpu.vector_store %arg13[%c0_42, %c0_43], %54 {strides = array<i32>} : memref<8x128xf32, #tpu.memory_space<vmem>>, vector<8x128xf32>,
    } else {
    }
    %c0 = arith.constant 0 : index
    %c0_1 = arith.constant 0 : index
    %c0_2 = arith.constant 0 : index
    %3 = vector.load %arg6[%c0, %c0_1, %c0_2] : memref<1x8x128xf32, #tpu.memory_space<vmem>>, vector<1x8x128xf32>
    %4 = vector.shape_cast %3 : vector<1x8x128xf32> to vector<8x128xf32>
    %5 = arith.truncf %4 : vector<8x128xf32> to vector<8x128xbf16>
    %c0_3 = arith.constant 0 : index
    %c0_4 = arith.constant 0 : index
    %c0_5 = arith.constant 0 : index
    %6 = vector.load %arg7[%c0_3, %c0_4, %c0_5] : memref<1x8x128xf32, #tpu.memory_space<vmem>>, vector<1x8x128xf32>
    %7 = vector.shape_cast %6 : vector<1x8x128xf32> to vector<8x128xf32>
    %8 = arith.truncf %7 : vector<8x128xf32> to vector<8x128xbf16>
    %c0_6 = arith.constant 0 : index
    %c0_7 = arith.constant 0 : index
    %9 = vector.load %arg10[%c0_6, %c0_7] : memref<8x128xbf16, #tpu.memory_space<vmem>>, vector<8x128xbf16>
    %cst = arith.constant dense<0.000000e+00> : vector<128x128xf32>
    %10 = tpu.matmul %5, %9, %cst {dimension_numbers = #tpu.dot_dimension_numbers<[0], [0], [1], [1], [0, 1, 1, 1], [], []>} : vector<8x128xbf16>, vector<8x128xbf16>, vector<128x128xf32> -> vector<128x128xf32>
    %c0_8 = arith.constant 0 : index
    %c0_9 = arith.constant 0 : index
    %11 = vector.load %arg11[%c0_8, %c0_9] : memref<1x128xf32, #tpu.memory_space<vmem>>, vector<1x128xf32>
    %cst_10 = arith.constant dense<0xFF800000> : vector<128xf32>
    %12 = vector.multi_reduction <maximumf>, %10, %cst_10 [0] : vector<128x128xf32> to vector<128xf32>
    %13 = vector.shape_cast %12 : vector<128xf32> to vector<1x128xf32>
    %14 = arith.maximumf %11, %13 : vector<1x128xf32>
    %15 = arith.subf %11, %14 : vector<1x128xf32>
    %16 = math.exp %15 : vector<1x128xf32>
    %17 = vector.broadcast %14 : vector<1x128xf32> to vector<128x128xf32>
    %18 = arith.subf %10, %17 : vector<128x128xf32>
    %19 = math.exp %18 : vector<128x128xf32>
    %c0_11 = arith.constant 0 : index
    %c0_12 = arith.constant 0 : index
    %20 = vector.load %arg12[%c0_11, %c0_12] : memref<1x128xf32, #tpu.memory_space<vmem>>, vector<1x128xf32>
    %21 = arith.mulf %16, %20 : vector<1x128xf32>
    %cst_13 = arith.constant dense<0.000000e+00> : vector<128xf32>
    %22 = vector.multi_reduction <add>, %19, %cst_13 [0] : vector<128x128xf32> to vector<128xf32>
    %23 = vector.shape_cast %22 : vector<128xf32> to vector<1x128xf32>
    %24 = arith.addf %21, %23 : vector<1x128xf32>
    %c0_14 = arith.constant 0 : index
    %c0_15 = arith.constant 0 : index
    %25 = vector.load %arg12[%c0_14, %c0_15] : memref<1x128xf32, #tpu.memory_space<vmem>>, vector<1x128xf32>
    tpu.vector_store %arg12[%c0_14, %c0_15], %24 {strides = array<i32>} : memref<1x128xf32, #tpu.memory_space<vmem>>, vector<1x128xf32>,
    %c0_16 = arith.constant 0 : index
    %c0_17 = arith.constant 0 : index
    %26 = vector.load %arg13[%c0_16, %c0_17] : memref<8x128xf32, #tpu.memory_space<vmem>>, vector<8x128xf32>
    %27 = vector.broadcast %16 : vector<1x128xf32> to vector<8x128xf32>
    %28 = arith.mulf %27, %26 : vector<8x128xf32>
    %29 = arith.truncf %19 : vector<128x128xf32> to vector<128x128xbf16>
    %cst_18 = arith.constant dense<0.000000e+00> : vector<8x128xf32>
    %30 = tpu.matmul %8, %29, %cst_18 {dimension_numbers = #tpu.dot_dimension_numbers<[1], [0], [0], [1], [0, 0, 1, 1], [], []>} : vector<8x128xbf16>, vector<128x128xbf16>, vector<8x128xf32> -> vector<8x128xf32>
    %31 = arith.addf %28, %30 : vector<8x128xf32>
    %c0_19 = arith.constant 0 : index
    %c0_20 = arith.constant 0 : index
    %32 = vector.load %arg13[%c0_19, %c0_20] : memref<8x128xf32, #tpu.memory_space<vmem>>, vector<8x128xf32>
    tpu.vector_store %arg13[%c0_19, %c0_20], %31 {strides = array<i32>} : memref<8x128xf32, #tpu.memory_space<vmem>>, vector<8x128xf32>,
    %c0_21 = arith.constant 0 : index
    %c0_22 = arith.constant 0 : index
    %33 = vector.load %arg11[%c0_21, %c0_22] : memref<1x128xf32, #tpu.memory_space<vmem>>, vector<1x128xf32>
    tpu.vector_store %arg11[%c0_21, %c0_22], %14 {strides = array<i32>} : memref<1x128xf32, #tpu.memory_space<vmem>>, vector<1x128xf32>,
    %c1_i32 = arith.constant 1 : i32
    %34 = arith.cmpi eq, %arg2, %c1_i32 : i32
    %35 = arith.extui %34 : i1 to i32
    %c0_i32_23 = arith.constant 0 : i32
    %36 = arith.cmpi ne, %35, %c0_i32_23 : i32
    scf.if %36 {
      %c0_24 = arith.constant 0 : index
      %c0_25 = arith.constant 0 : index
      %37 = vector.load %arg13[%c0_24, %c0_25] : memref<8x128xf32, #tpu.memory_space<vmem>>, vector<8x128xf32>
      %c0_26 = arith.constant 0 : index
      %c0_27 = arith.constant 0 : index
      %38 = vector.load %arg12[%c0_26, %c0_27] : memref<1x128xf32, #tpu.memory_space<vmem>>, vector<1x128xf32>
      %39 = vector.broadcast %38 : vector<1x128xf32> to vector<8x128xf32>
      %40 = arith.divf %37, %39 : vector<8x128xf32>
      %c0_28 = arith.constant 0 : index
      %41 = memref.load %arg8[%c0_28] : memref<1xf32, #tpu.memory_space<smem>>
      %42 = vector.broadcast %41 : f32 to vector<8x128xf32>
      %43 = arith.mulf %42, %40 : vector<8x128xf32>
      %c0_29 = arith.constant 0 : index
      %c0_30 = arith.constant 0 : index
      %c0_31 = arith.constant 0 : index
      %44 = vector.load %arg3[%c0_29, %c0_30, %c0_31] : memref<1x8x128xf32, #tpu.memory_space<vmem>>, vector<1x8x128xf32>
      %45 = vector.shape_cast %44 : vector<1x8x128xf32> to vector<8x128xf32>
      %46 = arith.addf %43, %45 : vector<8x128xf32>
      %c0_32 = arith.constant 0 : index
      %c0_33 = arith.constant 0 : index
      %c0_34 = arith.constant 0 : index
      %47 = vector.load %arg9[%c0_32, %c0_33, %c0_34] : memref<1x8x128xf32, #tpu.memory_space<vmem>>, vector<1x8x128xf32>
      %48 = vector.shape_cast %47 : vector<1x8x128xf32> to vector<8x128xf32>
      %49 = vector.shape_cast %46 : vector<8x128xf32> to vector<1x8x128xf32>
      tpu.vector_store %arg9[%c0_32, %c0_33, %c0_34], %49 {strides = array<i32>} : memref<1x8x128xf32, #tpu.memory_space<vmem>>, vector<1x8x128xf32>,
    } else {
    }
    return
  }
  func.func @transform_0(%arg0: i32, %arg1: i32, %arg2: i32) -> (i32, i32, i32) {
    %c0_i32 = arith.constant 0 : i32
    %c0_i32_0 = arith.constant 0 : i32
    return %arg0, %c0_i32, %arg1 : i32, i32, i32
  }
  func.func @transform_1(%arg0: i32, %arg1: i32, %arg2: i32) -> (i32, i32) {
    %c0_i32 = arith.constant 0 : i32
    %c0_i32_0 = arith.constant 0 : i32
    %c0_i32_1 = arith.constant 0 : i32
    return %c0_i32, %c0_i32_0 : i32, i32
  }
  func.func @transform_2(%arg0: i32, %arg1: i32, %arg2: i32) -> (i32, i32) {
    %c0_i32 = arith.constant 0 : i32
    %c0_i32_0 = arith.constant 0 : i32
    %c0_i32_1 = arith.constant 0 : i32
    return %c0_i32, %c0_i32_0 : i32, i32
  }
  func.func @transform_3(%arg0: i32, %arg1: i32, %arg2: i32) -> (i32, i32, i32) {
    %c0_i32 = arith.constant 0 : i32
    %c0_i32_0 = arith.constant 0 : i32
    return %arg0, %c0_i32, %arg2 : i32, i32, i32
  }
  func.func @transform_4(%arg0: i32, %arg1: i32, %arg2: i32) -> (i32, i32, i32) {
    %c0_i32 = arith.constant 0 : i32
    %c0_i32_0 = arith.constant 0 : i32
    return %arg0, %c0_i32, %arg2 : i32, i32, i32
  }
  func.func @transform_5(%arg0: i32, %arg1: i32, %arg2: i32) -> i32 {
    %c0_i32 = arith.constant 0 : i32
    %c0_i32_0 = arith.constant 0 : i32
    return %c0_i32 : i32
  }
  func.func @transform_6(%arg0: i32, %arg1: i32, %arg2: i32) -> (i32, i32, i32) {
    %c0_i32 = arith.constant 0 : i32
    %c0_i32_0 = arith.constant 0 : i32
    return %arg0, %c0_i32, %arg1 : i32, i32, i32
  }
}

</mosaic_0001>

<llo_original>
// kernel: self_attention_pallas.2
$region0: #{self_attention_pallas.2}
  #allocation0 [shape = 'u32[]', space=smem, size = 0x4, offset = 0x4, fixed_abs, tag = 'smem constant byte address 0x4 - core index']
  #allocation1 [shape = 'u32[144,128]{1,0:T(1,128)}', space=vmem, size = 0x12000, scoped, tag = 'internal scratch']
  %s0 = inlined_call_operand.vmem [shape: f32[2,8,256], index: 0, kind: input, shape index: {}]
  %s1 = inlined_call_operand.vmem [shape: f32[16,8], index: 1, kind: input, shape index: {}]
  %s2 = inlined_call_operand.vmem [shape: f32[16,1], index: 2, kind: input, shape index: {}]
  %s3 = inlined_call_operand.vmem [shape: f32[2,8,256], index: 3, kind: output, shape index: {0}]
  %s4 = inlined_call_operand.vmem [shape: f32[2,8,256], index: 4, kind: output, shape index: {1}]
  %5 = xla_tuple %s3, %s4
  %s6 = sld [smem:[#allocation0]]
  $region53: #{self_attention_pallas.2} parent=0
    _
  %s8 = ssub.s32 1, %s6
  %s9 = scalar_select 0, %s8, %s6
  loop: start=0, step=1, limit=6
  $region2: #{self_attention_pallas.2} parent=0 // loop_pre_header
    _
  $region3: #{self_attention_pallas.2} parent=0 // loop_header
    %s11 = sphi 0, %s15
    %p12 = scmp.ge.s32.totalorder %s11, 6
    %s18 = sphi 0, %s30
    %s19 = sphi 0, %s26
    %s20 = sphi 0, %s18
    %s21 = sphi 0, %s19
    %s22 = sphi 0, %s20
    %s23 = sphi 0, %s21
    %s35 = sphi 0, %s37
    %s38 = sphi 0, %s35
    %s39 = sphi 0, %s38
    %s55 = sphi 0, %s39
    %s59 = sphi 0, %s59
    %s61 = sphi 0, %s59
    %s62 = sphi 0, %s61
    %s76 = sphi 0, %s62
    %s80 = sphi 0, %s80
    %s82 = sphi 0, %s80
    %s83 = sphi 0, %s82
    %s97 = sphi 0, %s83
    %s105 = sphi 0, %s107
    %s108 = sphi 0, %s105
    %s109 = sphi 0, %s108
    %s125 = sphi 0, %s109
    %s133 = sphi 0, %s135
    %s136 = sphi 0, %s133
    %s137 = sphi 0, %s136
    %s153 = sphi 0, %s137
  $region4: #{self_attention_pallas.2} parent=0 // loop_header_branch
    %14 = sbr.rel (%p12) target = $region8
  $region5: #{self_attention_pallas.2} parent=0 // loop_body
    %s16 = ssub.s32 %s11, 1
    %s17 = ssub.s32 %s11, 2
    %s24 = sadd.s32 1, %s19
    %p25 = scmp.ge.s32.totalorder %s24, 2
    %s26 = scalar_select %p25, 0, %s24
    %s27 = sadd.s32 1, %s18
    %s28 = scalar_select %p25, %s27, %s18
    %p29 = scmp.ge.s32.totalorder %s28, 2
    %s30 = scalar_select %p29, 0, %s28
    %s31 = ssub.s32 %s18, %s30
    %s32 = ssub.s32 %s19, %s26
    %s33 = sor.u32 %s31, %s32
    %p34 = scmp.eq.s32.totalorder %s33, 0
    %s36 = sadd.s32 %s35, 1
    %s37 = scalar_select %p34, %s35, %s36
    %p40 = pneg %p34
    %p41 = scmp.eq.s32.totalorder %s11, 3
    %p42 = por %p40, %p41
    %p43 = scmp.ne.s32.totalorder %s35, %s38
    %p44 = scmp.eq.s32.totalorder %s11, 0
    %p45 = por %p43, %p44
    %p46 = scmp.ne.s32.totalorder %s35, %s38
    %p47 = scmp.eq.s32.totalorder %s16, 3
    %p48 = por %p46, %p47
    %p49 = scmp.ne.s32.totalorder %s38, %s39
    %p50 = scmp.eq.s32.totalorder %s16, 0
    %p51 = por %p49, %p50
    %p52 = scmp.ne.s32.totalorder %s38, %s39
    %p53 = scmp.eq.s32.totalorder %s17, 3
    %p54 = por %p52, %p53
    %p56 = scmp.ne.s32.totalorder %s39, %s55
    %p57 = scmp.eq.s32.totalorder %s17, 0
    %p58 = por %p56, %p57
    %s60 = sadd.s32 %s59, 1
    %p63 = scmp.eq.s32.totalorder %s11, 3
    %p64 = scmp.ne.s32.totalorder %s59, %s61
    %p65 = scmp.eq.s32.totalorder %s11, 0
    %p66 = por %p64, %p65
    %p67 = scmp.ne.s32.totalorder %s59, %s61
    %p68 = scmp.eq.s32.totalorder %s16, 3
    %p69 = por %p67, %p68
    %p70 = scmp.ne.s32.totalorder %s61, %s62
    %p71 = scmp.eq.s32.totalorder %s16, 0
    %p72 = por %p70, %p71
    %p73 = scmp.ne.s32.totalorder %s61, %s62
    %p74 = scmp.eq.s32.totalorder %s17, 3
    %p75 = por %p73, %p74
    %p77 = scmp.ne.s32.totalorder %s62, %s76
    %p78 = scmp.eq.s32.totalorder %s17, 0
    %p79 = por %p77, %p78
    %s81 = sadd.s32 %s80, 1
    %p84 = scmp.eq.s32.totalorder %s11, 3
    %p85 = scmp.ne.s32.totalorder %s80, %s82
    %p86 = scmp.eq.s32.totalorder %s11, 0
    %p87 = por %p85, %p86
    %p88 = scmp.ne.s32.totalorder %s80, %s82
    %p89 = scmp.eq.s32.totalorder %s16, 3
    %p90 = por %p88, %p89
    %p91 = scmp.ne.s32.totalorder %s82, %s83
    %p92 = scmp.eq.s32.totalorder %s16, 0
    %p93 = por %p91, %p92
    %p94 = scmp.ne.s32.totalorder %s82, %s83
    %p95 = scmp.eq.s32.totalorder %s17, 3
    %p96 = por %p94, %p95
    %p98 = scmp.ne.s32.totalorder %s83, %s97
    %p99 = scmp.eq.s32.totalorder %s17, 0
    %p100 = por %p98, %p99
    %s101 = ssub.s32 %s18, %s30
    %s102 = ssub.s32 %s19, %s26
    %s103 = sor.u32 %s101, %s102
    %p104 = scmp.eq.s32.totalorder %s103, 0
    %s106 = sadd.s32 %s105, 1
    %s107 = scalar_select %p104, %s105, %s106
    %p110 = pneg %p104
    %p111 = scmp.eq.s32.totalorder %s11, 3
    %p112 = por %p110, %p111
    %p113 = scmp.ne.s32.totalorder %s105, %s108
    %p114 = scmp.eq.s32.totalorder %s11, 0
    %p115 = por %p113, %p114
    %p116 = scmp.ne.s32.totalorder %s105, %s108
    %p117 = scmp.eq.s32.totalorder %s16, 3
    %p118 = por %p116, %p117
    %p119 = scmp.ne.s32.totalorder %s108, %s109
    %p120 = scmp.eq.s32.totalorder %s16, 0
    %p121 = por %p119, %p120
    %p122 = scmp.ne.s32.totalorder %s108, %s109
    %p123 = scmp.eq.s32.totalorder %s17, 3
    %p124 = por %p122, %p123
    %p126 = scmp.ne.s32.totalorder %s109, %s125
    %p127 = scmp.eq.s32.totalorder %s17, 0
    %p128 = por %p126, %p127
    %s129 = ssub.s32 %s18, %s30
    %s130 = ssub.s32 %s19, %s26
    %s131 = sor.u32 %s129, %s130
    %p132 = scmp.eq.s32.totalorder %s131, 0
    %s134 = sadd.s32 %s133, 1
    %s135 = scalar_select %p132, %s133, %s134
    %p138 = pneg %p132
    %p139 = scmp.eq.s32.totalorder %s11, 3
    %p140 = por %p138, %p139
    %p141 = scmp.ne.s32.totalorder %s133, %s136
    %p142 = scmp.eq.s32.totalorder %s11, 0
    %p143 = por %p141, %p142
    %p144 = scmp.ne.s32.totalorder %s133, %s136
    %p145 = scmp.eq.s32.totalorder %s16, 3
    %p146 = por %p144, %p145
    %p147 = scmp.ne.s32.totalorder %s136, %s137
    %p148 = scmp.eq.s32.totalorder %s16, 0
    %p149 = por %p147, %p148
    %p150 = scmp.ne.s32.totalorder %s136, %s137
    %p151 = scmp.eq.s32.totalorder %s17, 3
    %p152 = por %p150, %p151
    %p154 = scmp.ne.s32.totalorder %s137, %s153
    %p155 = scmp.eq.s32.totalorder %s17, 0
    %p156 = por %p154, %p155
    %p157 = scmp.le.s32.totalorder 1, %s11
    %p158 = scmp.lt.s32.totalorder %s11, 5
    %p159 = pnand %p157, %p158
    %p160 = pneg %p159
    // Predicated region
    $region9: #{self_attention_pallas.2} parent=5 // pred_check
      _
    $region10: #{self_attention_pallas.2} parent=5 // pred_check_branch
      %162 = sbr.rel (%p159) target = $region12
    $region11: #{self_attention_pallas.2} parent=5 // pred_region
      %s163 = ssub.s32 %s11, 1
      // Predicated region
      $region13: #{self_attention_pallas.2} parent=11 // pred_check
        %p164 = pneg %p72
      $region14: #{self_attention_pallas.2} parent=11 // pred_check_branch
        %166 = sbr.rel (%p164) target = $region16
      $region15: #{self_attention_pallas.2} parent=11 // pred_region
        _
      $region16: #{self_attention_pallas.2} parent=11 // pred_fallthru
        _
      // Predicated region
      $region17: #{self_attention_pallas.2} parent=11 // pred_check
        %p167 = pneg %p93
      $region18: #{self_attention_pallas.2} parent=11 // pred_check_branch
        %169 = sbr.rel (%p167) target = $region20
      $region19: #{self_attention_pallas.2} parent=11 // pred_region
        _
      $region20: #{self_attention_pallas.2} parent=11 // pred_fallthru
        _
    $region12: #{self_attention_pallas.2} parent=5 // pred_fallthru
      _
    %p170 = scmp.lt.s32.totalorder %s11, 4
    // Predicated region
    $region21: #{self_attention_pallas.2} parent=5 // pred_check
      %p171 = pneg %p170
    $region22: #{self_attention_pallas.2} parent=5 // pred_check_branch
      %173 = sbr.rel (%p171) target = $region24
    $region23: #{self_attention_pallas.2} parent=5 // pred_region
      // Predicated region
      $region25: #{self_attention_pallas.2} parent=23 // pred_check
        %p174 = pneg %p45
      $region26: #{self_attention_pallas.2} parent=23 // pred_check_branch
        %176 = sbr.rel (%p174) target = $region28
      $region27: #{self_attention_pallas.2} parent=23 // pred_region
        %p177 = scmp.lt.s32.totalorder %s18, 1
        %s178 = scalar_select %p177, %s18, 1
        %p179 = scmp.lt.s32.totalorder %s19, 1
        %s180 = scalar_select %p179, %s19, 1
        %s181 = smul.addr %s178, 2
        %s182 = sadd.s32 %s180, %s181
        %s183 = smul.addr %s182, 8
        %s184 = scalar_lea.vmem %s0, %s183
      $region28: #{self_attention_pallas.2} parent=23 // pred_fallthru
        _
    $region24: #{self_attention_pallas.2} parent=5 // pred_fallthru
      _
    %p185 = scmp.le.s32.totalorder 1, %s11
    %p186 = scmp.lt.s32.totalorder %s11, 5
    %p187 = pnand %p185, %p186
    %p188 = pneg %p187
    // Predicated region
    $region29: #{self_attention_pallas.2} parent=5 // pred_check
      _
    $region30: #{self_attention_pallas.2} parent=5 // pred_check_branch
      %190 = sbr.rel (%p187) target = $region32
    $region31: #{self_attention_pallas.2} parent=5 // pred_region
      %s191 = ssub.s32 %s11, 1
      %p192 = scmp.lt.s32.totalorder %s20, 1
      %s193 = scalar_select %p192, %s20, 1
      %p194 = scmp.lt.s32.totalorder %s21, 1
      %s195 = scalar_select %p194, %s21, 1
      %s196 = smul.addr %s193, 2
      %s197 = sadd.s32 %s195, %s196
      %s198 = smul.addr %s197, 8
      %s199 = scalar_lea.vmem %s0, %s198
      %p200 = pneg %p51
      %p201 = pneg %p48
      %p202 = pneg %p72
      %p203 = pneg %p69
      %p204 = pneg %p93
      %p205 = pneg %p90
      %p206 = pneg %p121
      %p207 = pneg %p118
      %p208 = scmp.lt.s32.totalorder %s20, 1
      %s209 = scalar_select %p208, %s20, 1
      %p210 = scmp.lt.s32.totalorder %s21, 1
      %s211 = scalar_select %p210, %s21, 1
      %s212 = smul.addr %s209, 2
      %s213 = sadd.s32 %s211, %s212
      %s214 = smul.addr %s213, 8
      %s215 = scalar_lea.vmem %s3, %s214
      %p216 = pneg %p149
      %p217 = pneg %p146
      %p218 = scmp.lt.s32.totalorder %s20, 1
      %s219 = scalar_select %p218, %s20, 1
      %p220 = scmp.lt.s32.totalorder %s21, 1
      %s221 = scalar_select %p220, %s21, 1
      %s222 = smul.addr %s219, 2
      %s223 = sadd.s32 %s221, %s222
      %s224 = smul.addr %s223, 8
      %s225 = scalar_lea.vmem %s4, %s224
      %p226 = scmp.lt.s32.totalorder %s20, 1
      %s227 = scalar_select %p226, %s20, 1
      %p228 = scmp.lt.s32.totalorder %s21, 1
      %s229 = scalar_select %p228, %s21, 1
      %s230 = smul.addr %s227, 2
      %s231 = sadd.s32 %s229, %s230
      %s232 = smul.addr %s231, 8
      %s233 = scalar_lea.vmem %s0, %s232
      %p234 = scmp.lt.s32.totalorder %s20, 1
      %s235 = scalar_select %p234, %s20, 1
      %p236 = scmp.lt.s32.totalorder %s21, 1
      %s237 = scalar_select %p236, %s21, 1
      %s238 = smul.addr %s235, 2
      %s239 = sadd.s32 %s237, %s238
      %s240 = smul.addr %s239, 8
      %s241 = scalar_lea.vmem %s3, %s240
      %p242 = scmp.lt.s32.totalorder %s20, 1
      %s243 = scalar_select %p242, %s20, 1
      %p244 = scmp.lt.s32.totalorder %s21, 1
      %s245 = scalar_select %p244, %s21, 1
      %s246 = smul.addr %s243, 2
      %s247 = sadd.s32 %s245, %s246
      %s248 = smul.addr %s247, 8
      %s249 = scalar_lea.vmem %s4, %s248
      %v251 = vld [vmem:[%s233] sm:$0xff]
      %v252 = vpack.c.bf16 %v251, %v251
      %v253 = vld [vmem:[%s1] sm:$0xff]
      %v254 = vld [vmem:[%s1 + $0x8] sm:$0xff]
      %v255 = vpack.c.bf16 %v254, %v253
      %v256 = vld [vmem:[%s2] sm:$0xff]
      %v257 = vld [vmem:[%s2 + $0x8] sm:$0xff]
      %259 = vset.pattern.permute.xlu0 0
      %260 = vperm.xlu0 %259, %v256
      %v261 = vpop.permute.xlu0 %260
      %264 = vset.pattern.permute.xlu0 0
      %265 = vperm.xlu0 %264, %v257
      %v266 = vpop.permute.xlu0 %265
      %vm268 = vcmask 64512
      %v270 = vsel %vm268, %v255, 0
      %vm272 = vcmask 1043456
      %v274 = vsel %vm272, %v252, 0
      %276 = vmatprep.subr.bf16.mxu0 0
      %277 = vmatpush1.bf16.msra.mxu0 %v274
      %278 = vmatprep.subr.bf16.mxu0 0
      %279 = vmatpush1.bf16.msra.mxu0 0
      %280 = vmatprep.subr.bf16.mxu0 0
      %281 = vmatpush1.bf16.msra.mxu0 0
      %282 = vmatprep.subr.bf16.mxu0 0
      %283 = vmatpush1.bf16.msra.mxu0 0
      %284 = vmatprep.subr.bf16.mxu0 0
      %285 = vmatpush1.bf16.msra.mxu0 0
      %286 = vmatprep.subr.bf16.mxu0 0
      %287 = vmatpush1.bf16.msra.mxu0 0
      %288 = vmatprep.subr.bf16.mxu0 0
      %289 = vmatpush1.bf16.msra.mxu0 0
      %290 = vmatprep.subr.bf16.mxu0 0
      %291 = vmatpush1.bf16.msra.mxu0 0
      %292 = vmatprep.subr.bf16.mxu0 0
      %293 = vmatpush1.bf16.msra.mxu0 0
      %294 = vmatprep.subr.bf16.mxu0 0
      %295 = vmatpush1.bf16.msra.mxu0 0
      %296 = vmatprep.subr.bf16.mxu0 0
      %297 = vmatpush1.bf16.msra.mxu0 0
      %298 = vmatprep.subr.bf16.mxu0 0
      %299 = vmatpush1.bf16.msra.mxu0 0
      %300 = vmatprep.subr.bf16.mxu0 0
      %301 = vmatpush1.bf16.msra.mxu0 0
      %302 = vmatprep.subr.bf16.mxu0 0
      %303 = vmatpush1.bf16.msra.mxu0 0
      %304 = vmatprep.subr.bf16.mxu0 0
      %305 = vmatpush1.bf16.msra.mxu0 0
      %306 = vmatprep.subr.bf16.mxu0 0
      %307 = vmatpush1.bf16.msra.mxu0 0
      %308 = vmatprep.mubr.bf16.mxu0 0
      %309 = vmatmul.mubr.bf16.gmra.mrb[0].mxu0 %v270
      %v310 = vpop.f32.mrb[0].mxu0
      %v311 = vadd.f32 %v261, %v310
      %v312 = vpop.f32.mrb[0].mxu0
      %v313 = vpop.f32.mrb[0].mxu0
      %v314 = vadd.f32 %v266, %v313
      %v315 = vpop.f32.mrb[0].mxu0
      %316 = vdwg.mxu0
      %317 = vst [vmem:[%s241] sm:$0xff] %v311
      %318 = vst [vmem:[%s249] sm:$0xff] %v314
      %p319 = scmp.lt.s32.totalorder %s20, 1
      %s320 = scalar_select %p319, %s20, 1
      %p321 = scmp.lt.s32.totalorder %s21, 1
      %s322 = scalar_select %p321, %s21, 1
      %s323 = smul.addr %s320, 2
      %s324 = sadd.s32 %s322, %s323
      %s325 = smul.addr %s324, 8
      %s326 = scalar_lea.vmem %s3, %s325
      %p327 = scmp.lt.s32.totalorder %s20, 1
      %s328 = scalar_select %p327, %s20, 1
      %p329 = scmp.lt.s32.totalorder %s21, 1
      %s330 = scalar_select %p329, %s21, 1
      %s331 = smul.addr %s328, 2
      %s332 = sadd.s32 %s330, %s331
      %s333 = smul.addr %s332, 8
      %s334 = scalar_lea.vmem %s4, %s333
      // Predicated region
      $region33: #{self_attention_pallas.2} parent=31 // pred_check
        %p335 = pneg %p118
      $region34: #{self_attention_pallas.2} parent=31 // pred_check_branch
        %337 = sbr.rel (%p335) target = $region36
      $region35: #{self_attention_pallas.2} parent=31 // pred_region
        _
      $region36: #{self_attention_pallas.2} parent=31 // pred_fallthru
        _
      // Predicated region
      $region37: #{self_attention_pallas.2} parent=31 // pred_check
        %p338 = pneg %p146
      $region38: #{self_attention_pallas.2} parent=31 // pred_check_branch
        %340 = sbr.rel (%p338) target = $region40
      $region39: #{self_attention_pallas.2} parent=31 // pred_region
        _
      $region40: #{self_attention_pallas.2} parent=31 // pred_fallthru
        _
    $region32: #{self_attention_pallas.2} parent=5 // pred_fallthru
      _
    %p341 = scmp.le.s32.totalorder 2, %s11
    // Predicated region
    $region41: #{self_attention_pallas.2} parent=5 // pred_check
      %p342 = pneg %p341
    $region42: #{self_attention_pallas.2} parent=5 // pred_check_branch
      %344 = sbr.rel (%p342) target = $region44
    $region43: #{self_attention_pallas.2} parent=5 // pred_region
      %s345 = ssub.s32 %s11, 2
      // Predicated region
      $region45: #{self_attention_pallas.2} parent=43 // pred_check
        %p346 = pneg %p124
      $region46: #{self_attention_pallas.2} parent=43 // pred_check_branch
        %348 = sbr.rel (%p346) target = $region48
      $region47: #{self_attention_pallas.2} parent=43 // pred_region
        %p349 = scmp.lt.s32.totalorder %s22, 1
        %s350 = scalar_select %p349, %s22, 1
        %p351 = scmp.lt.s32.totalorder %s23, 1
        %s352 = scalar_select %p351, %s23, 1
        %s353 = smul.addr %s350, 2
        %s354 = sadd.s32 %s352, %s353
        %s355 = smul.addr %s354, 8
        %s356 = scalar_lea.vmem %s3, %s355
      $region48: #{self_attention_pallas.2} parent=43 // pred_fallthru
        _
      // Predicated region
      $region49: #{self_attention_pallas.2} parent=43 // pred_check
        %p357 = pneg %p152
      $region50: #{self_attention_pallas.2} parent=43 // pred_check_branch
        %359 = sbr.rel (%p357) target = $region52
      $region51: #{self_attention_pallas.2} parent=43 // pred_region
        %p360 = scmp.lt.s32.totalorder %s22, 1
        %s361 = scalar_select %p360, %s22, 1
        %p362 = scmp.lt.s32.totalorder %s23, 1
        %s363 = scalar_select %p362, %s23, 1
        %s364 = smul.addr %s361, 2
        %s365 = sadd.s32 %s363, %s364
        %s366 = smul.addr %s365, 8
        %s367 = scalar_lea.vmem %s4, %s366
      $region52: #{self_attention_pallas.2} parent=43 // pred_fallthru
        _
    $region44: #{self_attention_pallas.2} parent=5 // pred_fallthru
      _
  $region6: #{self_attention_pallas.2} parent=0 // loop_footer
    %s15 = sadd.s32 1, %s11
  $region7: #{self_attention_pallas.2} parent=0 // loop_footer_branch
    %10 = sbr.rel target = $region3
  $region8: #{self_attention_pallas.2} parent=0 // loop_exit
    _

// kernel: self_attention_pallas.3
$region0: #{self_attention_pallas.3}
  #allocation0 [shape = 'u32[]', space=smem, size = 0x4, offset = 0x4, fixed_abs, tag = 'smem constant byte address 0x4 - core index']
  #allocation1 [shape = 'u32[144,128]{1,0:T(1,128)}', space=vmem, size = 0x12000, scoped, tag = 'internal scratch']
  #allocation2 [shape = 'bf16[8,128]{1,0:T(8,128)(2,1)}', space=vmem, size = 0x800, scoped, tag = 'scratch operand']
  #allocation3 [shape = 'f32[1,128]{1,0:T(1,128)}', space=vmem, size = 0x200, scoped, tag = 'scratch operand']
  #allocation4 [shape = 'f32[1,128]{1,0:T(1,128)}', space=vmem, size = 0x200, scoped, tag = 'scratch operand']
  #allocation5 [shape = 'f32[8,128]{1,0:T(8,128)}', space=vmem, size = 0x1000, scoped, tag = 'scratch operand']
  #allocation6 [shape = 'f32[1]{0:T(128)S(6)}', space=smem, size = 0x200, scoped, tag = 'scoped memory for self_attention_pallas.3']
  %s0 = inlined_call_operand.vmem [shape: f32[2,8,256], index: 0, kind: input, shape index: {}, may-alias: {0,6}]
  %s1 = inlined_call_operand.vmem [shape: f32[8,8], index: 1, kind: input, shape index: {}]
  %s2 = inlined_call_operand.vmem [shape: f32[8,1], index: 2, kind: input, shape index: {}]
  %s3 = inlined_call_operand.vmem [shape: f32[2,8,256], index: 3, kind: input, shape index: {}]
  %s4 = inlined_call_operand.vmem [shape: f32[2,8,256], index: 4, kind: input, shape index: {}]
  %s5 = inlined_call_operand.<no memory space> [shape: f32[1], index: 5, kind: input, shape index: {}]
  %s6 = inlined_call_operand.vmem [shape: f32[2,8,256], index: 6, kind: output, shape index: {}, may-alias: {0,6}]
  %s7 = sld [smem:[#allocation0]]
  $region65: #{self_attention_pallas.3} parent=0
    _
  %s9 = ssub.s32 1, %s7
  %s10 = scalar_select 0, %s9, %s7
  %11 = sst [smem:[#allocation6]] %s5
  loop: start=0, step=1, limit=10
  $region2: #{self_attention_pallas.3} parent=0 // loop_pre_header
    _
  $region3: #{self_attention_pallas.3} parent=0 // loop_header
    %s13 = sphi 0, %s17
    %p14 = scmp.ge.s32.totalorder %s13, 10
    %s20 = sphi 0, %s39
    %s21 = sphi 0, %s35
    %s22 = sphi 0, %s31
    %s23 = sphi 0, %s20
    %s24 = sphi 0, %s21
    %s25 = sphi 0, %s22
    %s26 = sphi 0, %s23
    %s27 = sphi 0, %s24
    %s28 = sphi 0, %s25
    %s44 = sphi 0, %s46
    %s47 = sphi 0, %s44
    %s48 = sphi 0, %s47
    %s64 = sphi 0, %s48
    %s68 = sphi 0, %s68
    %s70 = sphi 0, %s68
    %s71 = sphi 0, %s70
    %s85 = sphi 0, %s71
    %s89 = sphi 0, %s89
    %s91 = sphi 0, %s89
    %s92 = sphi 0, %s91
    %s106 = sphi 0, %s92
    %s114 = sphi 0, %s116
    %s117 = sphi 0, %s114
    %s118 = sphi 0, %s117
    %s134 = sphi 0, %s118
    %s142 = sphi 0, %s144
    %s145 = sphi 0, %s142
    %s146 = sphi 0, %s145
    %s162 = sphi 0, %s146
    %s166 = sphi 0, %s166
    %s168 = sphi 0, %s166
    %s169 = sphi 0, %s168
    %s183 = sphi 0, %s169
    %s191 = sphi 0, %s193
    %s194 = sphi 0, %s191
    %s195 = sphi 0, %s194
    %s211 = sphi 0, %s195
  $region4: #{self_attention_pallas.3} parent=0 // loop_header_branch
    %16 = sbr.rel (%p14) target = $region8
  $region5: #{self_attention_pallas.3} parent=0 // loop_body
    %s18 = ssub.s32 %s13, 1
    %s19 = ssub.s32 %s13, 2
    %s29 = sadd.s32 1, %s22
    %p30 = scmp.ge.s32.totalorder %s29, 2
    %s31 = scalar_select %p30, 0, %s29
    %s32 = sadd.s32 1, %s21
    %s33 = scalar_select %p30, %s32, %s21
    %p34 = scmp.ge.s32.totalorder %s33, 2
    %s35 = scalar_select %p34, 0, %s33
    %s36 = sadd.s32 1, %s20
    %s37 = scalar_select %p34, %s36, %s20
    %p38 = scmp.ge.s32.totalorder %s37, 2
    %s39 = scalar_select %p38, 0, %s37
    %s40 = ssub.s32 %s20, %s39
    %s41 = ssub.s32 %s21, %s35
    %s42 = sor.u32 %s40, %s41
    %p43 = scmp.eq.s32.totalorder %s42, 0
    %s45 = sadd.s32 %s44, 1
    %s46 = scalar_select %p43, %s44, %s45
    %p49 = pneg %p43
    %p50 = scmp.eq.s32.totalorder %s13, 7
    %p51 = por %p49, %p50
    %p52 = scmp.ne.s32.totalorder %s44, %s47
    %p53 = scmp.eq.s32.totalorder %s13, 0
    %p54 = por %p52, %p53
    %p55 = scmp.ne.s32.totalorder %s44, %s47
    %p56 = scmp.eq.s32.totalorder %s18, 7
    %p57 = por %p55, %p56
    %p58 = scmp.ne.s32.totalorder %s47, %s48
    %p59 = scmp.eq.s32.totalorder %s18, 0
    %p60 = por %p58, %p59
    %p61 = scmp.ne.s32.totalorder %s47, %s48
    %p62 = scmp.eq.s32.totalorder %s19, 7
    %p63 = por %p61, %p62
    %p65 = scmp.ne.s32.totalorder %s48, %s64
    %p66 = scmp.eq.s32.totalorder %s19, 0
    %p67 = por %p65, %p66
    %s69 = sadd.s32 %s68, 1
    %p72 = scmp.eq.s32.totalorder %s13, 7
    %p73 = scmp.ne.s32.totalorder %s68, %s70
    %p74 = scmp.eq.s32.totalorder %s13, 0
    %p75 = por %p73, %p74
    %p76 = scmp.ne.s32.totalorder %s68, %s70
    %p77 = scmp.eq.s32.totalorder %s18, 7
    %p78 = por %p76, %p77
    %p79 = scmp.ne.s32.totalorder %s70, %s71
    %p80 = scmp.eq.s32.totalorder %s18, 0
    %p81 = por %p79, %p80
    %p82 = scmp.ne.s32.totalorder %s70, %s71
    %p83 = scmp.eq.s32.totalorder %s19, 7
    %p84 = por %p82, %p83
    %p86 = scmp.ne.s32.totalorder %s71, %s85
    %p87 = scmp.eq.s32.totalorder %s19, 0
    %p88 = por %p86, %p87
    %s90 = sadd.s32 %s89, 1
    %p93 = scmp.eq.s32.totalorder %s13, 7
    %p94 = scmp.ne.s32.totalorder %s89, %s91
    %p95 = scmp.eq.s32.totalorder %s13, 0
    %p96 = por %p94, %p95
    %p97 = scmp.ne.s32.totalorder %s89, %s91
    %p98 = scmp.eq.s32.totalorder %s18, 7
    %p99 = por %p97, %p98
    %p100 = scmp.ne.s32.totalorder %s91, %s92
    %p101 = scmp.eq.s32.totalorder %s18, 0
    %p102 = por %p100, %p101
    %p103 = scmp.ne.s32.totalorder %s91, %s92
    %p104 = scmp.eq.s32.totalorder %s19, 7
    %p105 = por %p103, %p104
    %p107 = scmp.ne.s32.totalorder %s92, %s106
    %p108 = scmp.eq.s32.totalorder %s19, 0
    %p109 = por %p107, %p108
    %s110 = ssub.s32 %s20, %s39
    %s111 = ssub.s32 %s22, %s31
    %s112 = sor.u32 %s110, %s111
    %p113 = scmp.eq.s32.totalorder %s112, 0
    %s115 = sadd.s32 %s114, 1
    %s116 = scalar_select %p113, %s114, %s115
    %p119 = pneg %p113
    %p120 = scmp.eq.s32.totalorder %s13, 7
    %p121 = por %p119, %p120
    %p122 = scmp.ne.s32.totalorder %s114, %s117
    %p123 = scmp.eq.s32.totalorder %s13, 0
    %p124 = por %p122, %p123
    %p125 = scmp.ne.s32.totalorder %s114, %s117
    %p126 = scmp.eq.s32.totalorder %s18, 7
    %p127 = por %p125, %p126
    %p128 = scmp.ne.s32.totalorder %s117, %s118
    %p129 = scmp.eq.s32.totalorder %s18, 0
    %p130 = por %p128, %p129
    %p131 = scmp.ne.s32.totalorder %s117, %s118
    %p132 = scmp.eq.s32.totalorder %s19, 7
    %p133 = por %p131, %p132
    %p135 = scmp.ne.s32.totalorder %s118, %s134
    %p136 = scmp.eq.s32.totalorder %s19, 0
    %p137 = por %p135, %p136
    %s138 = ssub.s32 %s20, %s39
    %s139 = ssub.s32 %s22, %s31
    %s140 = sor.u32 %s138, %s139
    %p141 = scmp.eq.s32.totalorder %s140, 0
    %s143 = sadd.s32 %s142, 1
    %s144 = scalar_select %p141, %s142, %s143
    %p147 = pneg %p141
    %p148 = scmp.eq.s32.totalorder %s13, 7
    %p149 = por %p147, %p148
    %p150 = scmp.ne.s32.totalorder %s142, %s145
    %p151 = scmp.eq.s32.totalorder %s13, 0
    %p152 = por %p150, %p151
    %p153 = scmp.ne.s32.totalorder %s142, %s145
    %p154 = scmp.eq.s32.totalorder %s18, 7
    %p155 = por %p153, %p154
    %p156 = scmp.ne.s32.totalorder %s145, %s146
    %p157 = scmp.eq.s32.totalorder %s18, 0
    %p158 = por %p156, %p157
    %p159 = scmp.ne.s32.totalorder %s145, %s146
    %p160 = scmp.eq.s32.totalorder %s19, 7
    %p161 = por %p159, %p160
    %p163 = scmp.ne.s32.totalorder %s146, %s162
    %p164 = scmp.eq.s32.totalorder %s19, 0
    %p165 = por %p163, %p164
    %s167 = sadd.s32 %s166, 1
    %p170 = scmp.eq.s32.totalorder %s13, 7
    %p171 = scmp.ne.s32.totalorder %s166, %s168
    %p172 = scmp.eq.s32.totalorder %s13, 0
    %p173 = por %p171, %p172
    %p174 = scmp.ne.s32.totalorder %s166, %s168
    %p175 = scmp.eq.s32.totalorder %s18, 7
    %p176 = por %p174, %p175
    %p177 = scmp.ne.s32.totalorder %s168, %s169
    %p178 = scmp.eq.s32.totalorder %s18, 0
    %p179 = por %p177, %p178
    %p180 = scmp.ne.s32.totalorder %s168, %s169
    %p181 = scmp.eq.s32.totalorder %s19, 7
    %p182 = por %p180, %p181
    %p184 = scmp.ne.s32.totalorder %s169, %s183
    %p185 = scmp.eq.s32.totalorder %s19, 0
    %p186 = por %p184, %p185
    %s187 = ssub.s32 %s20, %s39
    %s188 = ssub.s32 %s21, %s35
    %s189 = sor.u32 %s187, %s188
    %p190 = scmp.eq.s32.totalorder %s189, 0
    %s192 = sadd.s32 %s191, 1
    %s193 = scalar_select %p190, %s191, %s192
    %p196 = pneg %p190
    %p197 = scmp.eq.s32.totalorder %s13, 7
    %p198 = por %p196, %p197
    %p199 = scmp.ne.s32.totalorder %s191, %s194
    %p200 = scmp.eq.s32.totalorder %s13, 0
    %p201 = por %p199, %p200
    %p202 = scmp.ne.s32.totalorder %s191, %s194
    %p203 = scmp.eq.s32.totalorder %s18, 7
    %p204 = por %p202, %p203
    %p205 = scmp.ne.s32.totalorder %s194, %s195
    %p206 = scmp.eq.s32.totalorder %s18, 0
    %p207 = por %p205, %p206
    %p208 = scmp.ne.s32.totalorder %s194, %s195
    %p209 = scmp.eq.s32.totalorder %s19, 7
    %p210 = por %p208, %p209
    %p212 = scmp.ne.s32.totalorder %s195, %s211
    %p213 = scmp.eq.s32.totalorder %s19, 0
    %p214 = por %p212, %p213
    %p215 = scmp.le.s32.totalorder 1, %s13
    %p216 = scmp.lt.s32.totalorder %s13, 9
    %p217 = pnand %p215, %p216
    %p218 = pneg %p217
    // Predicated region
    $region9: #{self_attention_pallas.3} parent=5 // pred_check
      _
    $region10: #{self_attention_pallas.3} parent=5 // pred_check_branch
      %220 = sbr.rel (%p217) target = $region12
    $region11: #{self_attention_pallas.3} parent=5 // pred_region
      %s221 = ssub.s32 %s13, 1
      // Predicated region
      $region13: #{self_attention_pallas.3} parent=11 // pred_check
        %p222 = pneg %p81
      $region14: #{self_attention_pallas.3} parent=11 // pred_check_branch
        %224 = sbr.rel (%p222) target = $region16
      $region15: #{self_attention_pallas.3} parent=11 // pred_region
        _
      $region16: #{self_attention_pallas.3} parent=11 // pred_fallthru
        _
      // Predicated region
      $region17: #{self_attention_pallas.3} parent=11 // pred_check
        %p225 = pneg %p102
      $region18: #{self_attention_pallas.3} parent=11 // pred_check_branch
        %227 = sbr.rel (%p225) target = $region20
      $region19: #{self_attention_pallas.3} parent=11 // pred_region
        _
      $region20: #{self_attention_pallas.3} parent=11 // pred_fallthru
        _
      // Predicated region
      $region21: #{self_attention_pallas.3} parent=11 // pred_check
        %p228 = pneg %p179
      $region22: #{self_attention_pallas.3} parent=11 // pred_check_branch
        %230 = sbr.rel (%p228) target = $region24
      $region23: #{self_attention_pallas.3} parent=11 // pred_region
        _
      $region24: #{self_attention_pallas.3} parent=11 // pred_fallthru
        _
    $region12: #{self_attention_pallas.3} parent=5 // pred_fallthru
      _
    %p231 = scmp.lt.s32.totalorder %s13, 8
    // Predicated region
    $region25: #{self_attention_pallas.3} parent=5 // pred_check
      %p232 = pneg %p231
    $region26: #{self_attention_pallas.3} parent=5 // pred_check_branch
      %234 = sbr.rel (%p232) target = $region28
    $region27: #{self_attention_pallas.3} parent=5 // pred_region
      // Predicated region
      $region29: #{self_attention_pallas.3} parent=27 // pred_check
        %p235 = pneg %p54
      $region30: #{self_attention_pallas.3} parent=27 // pred_check_branch
        %237 = sbr.rel (%p235) target = $region32
      $region31: #{self_attention_pallas.3} parent=27 // pred_region
        %p238 = scmp.lt.s32.totalorder %s20, 1
        %s239 = scalar_select %p238, %s20, 1
        %p240 = scmp.lt.s32.totalorder %s21, 1
        %s241 = scalar_select %p240, %s21, 1
        %s242 = smul.addr %s239, 2
        %s243 = sadd.s32 %s241, %s242
        %s244 = smul.addr %s243, 8
        %s245 = scalar_lea.vmem %s0, %s244
      $region32: #{self_attention_pallas.3} parent=27 // pred_fallthru
        _
      // Predicated region
      $region33: #{self_attention_pallas.3} parent=27 // pred_check
        %p246 = pneg %p124
      $region34: #{self_attention_pallas.3} parent=27 // pred_check_branch
        %248 = sbr.rel (%p246) target = $region36
      $region35: #{self_attention_pallas.3} parent=27 // pred_region
        %p249 = scmp.lt.s32.totalorder %s20, 1
        %s250 = scalar_select %p249, %s20, 1
        %p251 = scmp.lt.s32.totalorder %s22, 1
        %s252 = scalar_select %p251, %s22, 1
        %s253 = smul.addr %s250, 2
        %s254 = sadd.s32 %s252, %s253
        %s255 = smul.addr %s254, 8
        %s256 = scalar_lea.vmem %s3, %s255
      $region36: #{self_attention_pallas.3} parent=27 // pred_fallthru
        _
      // Predicated region
      $region37: #{self_attention_pallas.3} parent=27 // pred_check
        %p257 = pneg %p152
      $region38: #{self_attention_pallas.3} parent=27 // pred_check_branch
        %259 = sbr.rel (%p257) target = $region40
      $region39: #{self_attention_pallas.3} parent=27 // pred_region
        %p260 = scmp.lt.s32.totalorder %s20, 1
        %s261 = scalar_select %p260, %s20, 1
        %p262 = scmp.lt.s32.totalorder %s22, 1
        %s263 = scalar_select %p262, %s22, 1
        %s264 = smul.addr %s261, 2
        %s265 = sadd.s32 %s263, %s264
        %s266 = smul.addr %s265, 8
        %s267 = scalar_lea.vmem %s4, %s266
      $region40: #{self_attention_pallas.3} parent=27 // pred_fallthru
        _
    $region28: #{self_attention_pallas.3} parent=5 // pred_fallthru
      _
    %p268 = scmp.le.s32.totalorder 1, %s13
    %p269 = scmp.lt.s32.totalorder %s13, 9
    %p270 = pnand %p268, %p269
    %p271 = pneg %p270
    // Predicated region
    $region41: #{self_attention_pallas.3} parent=5 // pred_check
      _
    $region42: #{self_attention_pallas.3} parent=5 // pred_check_branch
      %273 = sbr.rel (%p270) target = $region44
    $region43: #{self_attention_pallas.3} parent=5 // pred_region
      %s274 = ssub.s32 %s13, 1
      %p275 = scmp.lt.s32.totalorder %s23, 1
      %s276 = scalar_select %p275, %s23, 1
      %p277 = scmp.lt.s32.totalorder %s24, 1
      %s278 = scalar_select %p277, %s24, 1
      %s279 = smul.addr %s276, 2
      %s280 = sadd.s32 %s278, %s279
      %s281 = smul.addr %s280, 8
      %s282 = scalar_lea.vmem %s0, %s281
      %p283 = pneg %p60
      %p284 = pneg %p57
      %p285 = pneg %p81
      %p286 = pneg %p78
      %p287 = pneg %p102
      %p288 = pneg %p99
      %p289 = scmp.lt.s32.totalorder %s23, 1
      %s290 = scalar_select %p289, %s23, 1
      %p291 = scmp.lt.s32.totalorder %s25, 1
      %s292 = scalar_select %p291, %s25, 1
      %s293 = smul.addr %s290, 2
      %s294 = sadd.s32 %s292, %s293
      %s295 = smul.addr %s294, 8
      %s296 = scalar_lea.vmem %s3, %s295
      %p297 = pneg %p130
      %p298 = pneg %p127
      %p299 = scmp.lt.s32.totalorder %s23, 1
      %s300 = scalar_select %p299, %s23, 1
      %p301 = scmp.lt.s32.totalorder %s25, 1
      %s302 = scalar_select %p301, %s25, 1
      %s303 = smul.addr %s300, 2
      %s304 = sadd.s32 %s302, %s303
      %s305 = smul.addr %s304, 8
      %s306 = scalar_lea.vmem %s4, %s305
      %p307 = pneg %p158
      %p308 = pneg %p155
      %p309 = pneg %p179
      %p310 = pneg %p176
      %p311 = pneg %p207
      %p312 = pneg %p204
      %p313 = scmp.lt.s32.totalorder %s23, 1
      %s314 = scalar_select %p313, %s23, 1
      %p315 = scmp.lt.s32.totalorder %s24, 1
      %s316 = scalar_select %p315, %s24, 1
      %s317 = smul.addr %s314, 2
      %s318 = sadd.s32 %s316, %s317
      %s319 = smul.addr %s318, 8
      %s320 = scalar_lea.vmem %s6, %s319
      %p321 = scmp.lt.s32.totalorder %s23, 1
      %s322 = scalar_select %p321, %s23, 1
      %p323 = scmp.lt.s32.totalorder %s24, 1
      %s324 = scalar_select %p323, %s24, 1
      %s325 = smul.addr %s322, 2
      %s326 = sadd.s32 %s324, %s325
      %s327 = smul.addr %s326, 8
      %s328 = scalar_lea.vmem %s0, %s327
      %p329 = scmp.lt.s32.totalorder %s23, 1
      %s330 = scalar_select %p329, %s23, 1
      %p331 = scmp.lt.s32.totalorder %s25, 1
      %s332 = scalar_select %p331, %s25, 1
      %s333 = smul.addr %s330, 2
      %s334 = sadd.s32 %s332, %s333
      %s335 = smul.addr %s334, 8
      %s336 = scalar_lea.vmem %s3, %s335
      %p337 = scmp.lt.s32.totalorder %s23, 1
      %s338 = scalar_select %p337, %s23, 1
      %p339 = scmp.lt.s32.totalorder %s25, 1
      %s340 = scalar_select %p339, %s25, 1
      %s341 = smul.addr %s338, 2
      %s342 = sadd.s32 %s340, %s341
      %s343 = smul.addr %s342, 8
      %s344 = scalar_lea.vmem %s4, %s343
      %p345 = scmp.lt.s32.totalorder %s23, 1
      %s346 = scalar_select %p345, %s23, 1
      %p347 = scmp.lt.s32.totalorder %s24, 1
      %s348 = scalar_select %p347, %s24, 1
      %s349 = smul.addr %s346, 2
      %s350 = sadd.s32 %s348, %s349
      %s351 = smul.addr %s350, 8
      %s352 = scalar_lea.vmem %s6, %s351
      %p354 = scmp.eq.s32.totalorder %s25, 0
      // Predicated region
      $region45: #{self_attention_pallas.3} parent=43 // pred_check
        %p355 = pneg %p354
      $region46: #{self_attention_pallas.3} parent=43 // pred_check_branch
        %357 = sbr.rel (%p355) target = $region48
      $region47: #{self_attention_pallas.3} parent=43 // pred_region
        %v358 = vld [vmem:[%s328] sm:$0xff]
        %v359 = vpack.c.bf16 %v358, %v358
        %v360 = vld [vmem:[%s1] sm:$0xff]
        %v361 = vpack.c.bf16 %v360, %v360
        %v362 = vld [vmem:[%s2] sm:$0xff]
        %364 = vset.pattern.permute.xlu0 0
        %365 = vperm.xlu0 %364, %v362
        %v366 = vpop.permute.xlu0 %365
        %vm368 = vcmask 64512
        %v370 = vsel %vm368, %v361, 0
        %vm372 = vcmask 1043456
        %v374 = vsel %vm372, %v359, 0
        %376 = vmatprep.subr.bf16.mxu0 0
        %377 = vmatpush1.bf16.msra.mxu0 %v374
        %378 = vmatprep.subr.bf16.mxu0 0
        %379 = vmatpush1.bf16.msra.mxu0 0
        %380 = vmatprep.subr.bf16.mxu0 0
        %381 = vmatpush1.bf16.msra.mxu0 0
        %382 = vmatprep.subr.bf16.mxu0 0
        %383 = vmatpush1.bf16.msra.mxu0 0
        %384 = vmatprep.subr.bf16.mxu0 0
        %385 = vmatpush1.bf16.msra.mxu0 0
        %386 = vmatprep.subr.bf16.mxu0 0
        %387 = vmatpush1.bf16.msra.mxu0 0
        %388 = vmatprep.subr.bf16.mxu0 0
        %389 = vmatpush1.bf16.msra.mxu0 0
        %390 = vmatprep.subr.bf16.mxu0 0
        %391 = vmatpush1.bf16.msra.mxu0 0
        %392 = vmatprep.subr.bf16.mxu0 0
        %393 = vmatpush1.bf16.msra.mxu0 0
        %394 = vmatprep.subr.bf16.mxu0 0
        %395 = vmatpush1.bf16.msra.mxu0 0
        %396 = vmatprep.subr.bf16.mxu0 0
        %397 = vmatpush1.bf16.msra.mxu0 0
        %398 = vmatprep.subr.bf16.mxu0 0
        %399 = vmatpush1.bf16.msra.mxu0 0
        %400 = vmatprep.subr.bf16.mxu0 0
        %401 = vmatpush1.bf16.msra.mxu0 0
        %402 = vmatprep.subr.bf16.mxu0 0
        %403 = vmatpush1.bf16.msra.mxu0 0
        %404 = vmatprep.subr.bf16.mxu0 0
        %405 = vmatpush1.bf16.msra.mxu0 0
        %406 = vmatprep.subr.bf16.mxu0 0
        %407 = vmatpush1.bf16.msra.mxu0 0
        %408 = vmatprep.mubr.bf16.mxu0 0
        %409 = vmatmul.mubr.bf16.gmra.mrb[0].mxu0 %v370
        %v410 = vpop.f32.mrb[0].mxu0
        %v411 = vadd.f32 %v366, %v410
        %v412 = vpop.f32.mrb[0].mxu0
        %v413 = vpop.f32.mrb[0].mxu0
        %v414 = vpop.f32.mrb[0].mxu0
        %415 = vdwg.mxu0
        %v416 = vmul.f32 %v411, 0.5
        %v417 = vpack.c.bf16 %v416, %v416
        %418 = vst [vmem:[#allocation2] sm:$0xf] %v417
        %419 = vst [vmem:[#allocation3] sm:$0x1] -inf
        %420 = vst [vmem:[#allocation4] sm:$0x1] 0.0
        %421 = vst [vmem:[#allocation5] sm:$0xff] 0.0
      $region48: #{self_attention_pallas.3} parent=43 // pred_fallthru
        _
      %v422 = vld [vmem:[%s336] sm:$0xff]
      %v423 = vpack.c.bf16 %v422, %v422
      %v424 = vld [vmem:[%s344] sm:$0xff]
      %v425 = vpack.c.bf16 %v424, %v424
      %v426 = vld [vmem:[#allocation2] sm:$0xf]
      %427 = vxpose.xlu0.c.b16.start [1/8] %v423, 128
      %428 = vxpose.xlu0.c.b16.cont [2/8] 0, 128
      %429 = vxpose.xlu0.c.b16.cont [3/8] 0, 128
      %430 = vxpose.xlu0.c.b16.cont [4/8] 0, 128
      %431 = vxpose.xlu0.c.b16.cont [5/8] 0, 128
      %432 = vxpose.xlu0.c.b16.cont [6/8] 0, 128
      %433 = vxpose.xlu0.c.b16.cont [7/8] 0, 128
      %434 = vxpose.xlu0.c.b16.end [8/8] 0, 128
      %v435 = vpop.trf.xlu0
      %v436 = vpop.trf.xlu0
      %v437 = vpop.trf.xlu0
      %v438 = vpop.trf.xlu0
      %v439 = vpop.trf.xlu0
      %v440 = vpop.trf.xlu0
      %v441 = vpop.trf.xlu0
      %v442 = vpop.trf.xlu0
      %vm443 = vcmask 64512
      %v445 = vsel %vm443, %v435, 0
      %v448 = vsel %vm443, %v436, 0
      %v451 = vsel %vm443, %v437, 0
      %v454 = vsel %vm443, %v438, 0
      %v457 = vsel %vm443, %v439, 0
      %v460 = vsel %vm443, %v440, 0
      %v463 = vsel %vm443, %v441, 0
      %v466 = vsel %vm443, %v442, 0
      %vm468 = vcmask 1043456
      %v470 = vsel %vm468, %v426, 0
      %472 = vmatprep.subr.bf16.mxu0 0
      %473 = vmatpush1.bf16.msra.mxu0 %v470
      %474 = vmatprep.subr.bf16.mxu0 0
      %475 = vmatpush1.bf16.msra.mxu0 0
      %476 = vmatprep.subr.bf16.mxu0 0
      %477 = vmatpush1.bf16.msra.mxu0 0
      %478 = vmatprep.subr.bf16.mxu0 0
      %479 = vmatpush1.bf16.msra.mxu0 0
      %480 = vmatprep.subr.bf16.mxu0 0
      %481 = vmatpush1.bf16.msra.mxu0 0
      %482 = vmatprep.subr.bf16.mxu0 0
      %483 = vmatpush1.bf16.msra.mxu0 0
      %484 = vmatprep.subr.bf16.mxu0 0
      %485 = vmatpush1.bf16.msra.mxu0 0
      %486 = vmatprep.subr.bf16.mxu0 0
      %487 = vmatpush1.bf16.msra.mxu0 0
      %488 = vmatprep.subr.bf16.mxu0 0
      %489 = vmatpush1.bf16.msra.mxu0 0
      %490 = vmatprep.subr.bf16.mxu0 0
      %491 = vmatpush1.bf16.msra.mxu0 0
      %492 = vmatprep.subr.bf16.mxu0 0
      %493 = vmatpush1.bf16.msra.mxu0 0
      %494 = vmatprep.subr.bf16.mxu0 0
      %495 = vmatpush1.bf16.msra.mxu0 0
      %496 = vmatprep.subr.bf16.mxu0 0
      %497 = vmatpush1.bf16.msra.mxu0 0
      %498 = vmatprep.subr.bf16.mxu0 0
      %499 = vmatpush1.bf16.msra.mxu0 0
      %500 = vmatprep.subr.bf16.mxu0 0
      %501 = vmatpush1.bf16.msra.mxu0 0
      %502 = vmatprep.subr.bf16.mxu0 0
      %503 = vmatpush1.bf16.msra.mxu0 0
      %504 = vmatprep.mubr.bf16.mxu0 0
      %505 = vmatmul.mubr.bf16.gmra.mrb[0].mxu0 %v445
      %v506 = vpop.f32.mrb[0].mxu0
      %v507 = vadd.f32 0.0, %v506
      %v508 = vpop.f32.mrb[0].mxu0
      %v509 = vpop.f32.mrb[0].mxu0
      %v510 = vadd.f32 0.0, %v509
      %v511 = vpop.f32.mrb[0].mxu0
      %512 = vmatprep.mubr.bf16.mxu0 0
      %513 = vmatmul.mubr.bf16.gmra.mrb[0].mxu0 %v448
      %v514 = vpop.f32.mrb[0].mxu0
      %v515 = vadd.f32 0.0, %v514
      %v516 = vpop.f32.mrb[0].mxu0
      %v517 = vpop.f32.mrb[0].mxu0
      %v518 = vadd.f32 0.0, %v517
      %v519 = vpop.f32.mrb[0].mxu0
      %520 = vmatprep.mubr.bf16.mxu0 0
      %521 = vmatmul.mubr.bf16.gmra.mrb[0].mxu0 %v451
      %v522 = vpop.f32.mrb[0].mxu0
      %v523 = vadd.f32 0.0, %v522
      %v524 = vpop.f32.mrb[0].mxu0
      %v525 = vpop.f32.mrb[0].mxu0
      %v526 = vadd.f32 0.0, %v525
      %v527 = vpop.f32.mrb[0].mxu0
      %528 = vmatprep.mubr.bf16.mxu0 0
      %529 = vmatmul.mubr.bf16.gmra.mrb[0].mxu0 %v454
      %v530 = vpop.f32.mrb[0].mxu0
      %v531 = vadd.f32 0.0, %v530
      %v532 = vpop.f32.mrb[0].mxu0
      %v533 = vpop.f32.mrb[0].mxu0
      %v534 = vadd.f32 0.0, %v533
      %v535 = vpop.f32.mrb[0].mxu0
      %536 = vmatprep.mubr.bf16.mxu0 0
      %537 = vmatmul.mubr.bf16.gmra.mrb[0].mxu0 %v457
      %v538 = vpop.f32.mrb[0].mxu0
      %v539 = vadd.f32 0.0, %v538
      %v540 = vpop.f32.mrb[0].mxu0
      %v541 = vpop.f32.mrb[0].mxu0
      %v542 = vadd.f32 0.0, %v541
      %v543 = vpop.f32.mrb[0].mxu0
      %544 = vmatprep.mubr.bf16.mxu0 0
      %545 = vmatmul.mubr.bf16.gmra.mrb[0].mxu0 %v460
      %v546 = vpop.f32.mrb[0].mxu0
      %v547 = vadd.f32 0.0, %v546
      %v548 = vpop.f32.mrb[0].mxu0
      %v549 = vpop.f32.mrb[0].mxu0
      %v550 = vadd.f32 0.0, %v549
      %v551 = vpop.f32.mrb[0].mxu0
      %552 = vmatprep.mubr.bf16.mxu0 0
      %553 = vmatmul.mubr.bf16.gmra.mrb[0].mxu0 %v463
      %v554 = vpop.f32.mrb[0].mxu0
      %v555 = vadd.f32 0.0, %v554
      %v556 = vpop.f32.mrb[0].mxu0
      %v557 = vpop.f32.mrb[0].mxu0
      %v558 = vadd.f32 0.0, %v557
      %v559 = vpop.f32.mrb[0].mxu0
      %560 = vmatprep.mubr.bf16.mxu0 0
      %561 = vmatmul.mubr.bf16.gmra.mrb[0].mxu0 %v466
      %v562 = vpop.f32.mrb[0].mxu0
      %v563 = vadd.f32 0.0, %v562
      %v564 = vpop.f32.mrb[0].mxu0
      %v565 = vpop.f32.mrb[0].mxu0
      %v566 = vadd.f32 0.0, %v565
      %v567 = vpop.f32.mrb[0].mxu0
      %568 = vdwg.mxu0
      %v569 = vld [vmem:[#allocation3] sm:$0x1]
      %v570 = vmax.f32 %v507, %v523
      %v571 = vmax.f32 %v510, %v526
      %v572 = vmax.f32 %v515, %v531
      %v573 = vmax.f32 %v518, %v534
      %v574 = vmax.f32 %v570, %v539
      %v575 = vmax.f32 %v571, %v542
      %v576 = vmax.f32 %v572, %v547
      %v577 = vmax.f32 %v573, %v550
      %v578 = vmax.f32 %v574, %v555
      %v579 = vmax.f32 %v575, %v558
      %v580 = vmax.f32 %v576, %v563
      %v581 = vmax.f32 %v577, %v566
      %v582 = vmax.f32 %v578, %v579
      %v583 = vmax.f32 %v580, %v581
      %v584 = vmax.f32 %v582, %v583
      %v585 = vrot.slane %v584, 4
      %v586 = vmax.f32 %v584, %v585
      %v587 = vrot.slane %v586, 2
      %v588 = vmax.f32 %v586, %v587
      %v589 = vrot.slane %v588, 1
      %v590 = vmax.f32 %v588, %v589
      %v591 = vmax.f32 %v569, %v590
      %v592 = vsub.f32 %v569, %v591
      %v593 = vmul.f32 %v592, 1.442695
      %v594 = vpow.pop %v593
      %v596 = vlaneseq
      %v597 = vshrl.u32 %v596, 7
      %v598 = vsub.s32 0, %v597
      %v599 = vrot.slane %v591, %v598
      %v601 = vsub.f32 %v507, %v599
      %v602 = vsub.f32 %v510, %v599
      %v603 = vsub.f32 %v515, %v599
      %v604 = vsub.f32 %v518, %v599
      %v605 = vsub.f32 %v523, %v599
      %v606 = vsub.f32 %v526, %v599
      %v607 = vsub.f32 %v531, %v599
      %v608 = vsub.f32 %v534, %v599
      %v609 = vsub.f32 %v539, %v599
      %v610 = vsub.f32 %v542, %v599
      %v611 = vsub.f32 %v547, %v599
      %v612 = vsub.f32 %v550, %v599
      %v613 = vsub.f32 %v555, %v599
      %v614 = vsub.f32 %v558, %v599
      %v615 = vsub.f32 %v563, %v599
      %v616 = vsub.f32 %v566, %v599
      %v617 = vmul.f32 %v601, 1.442695
      %v618 = vpow.pop %v617
      %v619 = vmul.f32 %v602, 1.442695
      %v620 = vpow.pop %v619
      %v621 = vmul.f32 %v603, 1.442695
      %v622 = vpow.pop %v621
      %v623 = vmul.f32 %v604, 1.442695
      %v624 = vpow.pop %v623
      %v625 = vmul.f32 %v605, 1.442695
      %v626 = vpow.pop %v625
      %v627 = vmul.f32 %v606, 1.442695
      %v628 = vpow.pop %v627
      %v629 = vmul.f32 %v607, 1.442695
      %v630 = vpow.pop %v629
      %v631 = vmul.f32 %v608, 1.442695
      %v632 = vpow.pop %v631
      %v633 = vmul.f32 %v609, 1.442695
      %v634 = vpow.pop %v633
      %v635 = vmul.f32 %v610, 1.442695
      %v636 = vpow.pop %v635
      %v637 = vmul.f32 %v611, 1.442695
      %v638 = vpow.pop %v637
      %v639 = vmul.f32 %v612, 1.442695
      %v640 = vpow.pop %v639
      %v641 = vmul.f32 %v613, 1.442695
      %v642 = vpow.pop %v641
      %v643 = vmul.f32 %v614, 1.442695
      %v644 = vpow.pop %v643
      %v645 = vmul.f32 %v615, 1.442695
      %v646 = vpow.pop %v645
      %v647 = vmul.f32 %v616, 1.442695
      %v648 = vpow.pop %v647
      %v649 = vld [vmem:[#allocation4] sm:$0x1]
      %v650 = vmul.f32 %v594, %v649
      %v651 = vadd.f32 %v618, %v620
      %v652 = vadd.f32 %v651, %v622
      %v653 = vadd.f32 %v652, %v624
      %v654 = vadd.f32 %v653, %v626
      %v655 = vadd.f32 %v654, %v628
      %v656 = vadd.f32 %v655, %v630
      %v657 = vadd.f32 %v656, %v632
      %v658 = vadd.f32 %v657, %v634
      %v659 = vadd.f32 %v658, %v636
      %v660 = vadd.f32 %v659, %v638
      %v661 = vadd.f32 %v660, %v640
      %v662 = vadd.f32 %v661, %v642
      %v663 = vadd.f32 %v662, %v644
      %v664 = vadd.f32 %v663, %v646
      %v665 = vadd.f32 %v664, %v648
      %v666 = vrot.slane %v665, 4
      %v667 = vadd.f32 %v665, %v666
      %v668 = vrot.slane %v667, 2
      %v669 = vadd.f32 %v667, %v668
      %v670 = vrot.slane %v669, 1
      %v671 = vadd.f32 %v669, %v670
      %v672 = vadd.f32 %v650, %v671
      %673 = vst [vmem:[#allocation4] sm:$0x1] %v672
      %v674 = vld [vmem:[#allocation5] sm:$0xff]
      %v676 = vlaneseq
      %v677 = vshrl.u32 %v676, 7
      %v678 = vsub.s32 0, %v677
      %v679 = vrot.slane %v594, %v678
      %v681 = vmul.f32 %v679, %v674
      %v682 = vpack.c.bf16 %v620, %v618
      %v683 = vpack.c.bf16 %v624, %v622
      %v684 = vpack.c.bf16 %v628, %v626
      %v685 = vpack.c.bf16 %v632, %v630
      %v686 = vpack.c.bf16 %v636, %v634
      %v687 = vpack.c.bf16 %v640, %v638
      %v688 = vpack.c.bf16 %v644, %v642
      %v689 = vpack.c.bf16 %v648, %v646
      %690 = vmatprep.subr.bf16.mxu0 0
      %691 = vmatpush1.bf16.msra.mxu0 %v682
      %692 = vmatprep.subr.bf16.mxu0 0
      %693 = vmatpush1.bf16.msra.mxu0 %v683
      %694 = vmatprep.subr.bf16.mxu0 0
      %695 = vmatpush1.bf16.msra.mxu0 %v684
      %696 = vmatprep.subr.bf16.mxu0 0
      %697 = vmatpush1.bf16.msra.mxu0 %v685
      %698 = vmatprep.subr.bf16.mxu0 0
      %699 = vmatpush1.bf16.msra.mxu0 %v686
      %700 = vmatprep.subr.bf16.mxu0 0
      %701 = vmatpush1.bf16.msra.mxu0 %v687
      %702 = vmatprep.subr.bf16.mxu0 0
      %703 = vmatpush1.bf16.msra.mxu0 %v688
      %704 = vmatprep.subr.bf16.mxu0 0
      %705 = vmatpush1.bf16.msra.mxu0 %v689
      %706 = vmatprep.subr.bf16.mxu0 0
      %707 = vmatpush1.bf16.msra.mxu0 0
      %708 = vmatprep.subr.bf16.mxu0 0
      %709 = vmatpush1.bf16.msra.mxu0 0
      %710 = vmatprep.subr.bf16.mxu0 0
      %711 = vmatpush1.bf16.msra.mxu0 0
      %712 = vmatprep.subr.bf16.mxu0 0
      %713 = vmatpush1.bf16.msra.mxu0 0
      %714 = vmatprep.subr.bf16.mxu0 0
      %715 = vmatpush1.bf16.msra.mxu0 0
      %716 = vmatprep.subr.bf16.mxu0 0
      %717 = vmatpush1.bf16.msra.mxu0 0
      %718 = vmatprep.subr.bf16.mxu0 0
      %719 = vmatpush1.bf16.msra.mxu0 0
      %720 = vmatprep.subr.bf16.mxu0 0
      %721 = vmatpush1.bf16.msra.mxu0 0
      %722 = vmatprep.mubr.bf16.mxu0 0
      %723 = vmatmul.mubr.bf16.gmra.mrb[0].mxu0 %v425
      %v724 = vpop.f32.mrb[0].mxu0
      %v725 = vadd.f32 0.0, %v724
      %v726 = vpop.f32.mrb[0].mxu0
      %v727 = vpop.f32.mrb[0].mxu0
      %v728 = vpop.f32.mrb[0].mxu0
      %729 = vdwg.mxu0
      %v730 = vadd.f32 %v681, %v725
      %731 = vst [vmem:[#allocation5] sm:$0xff] %v730
      %732 = vst [vmem:[#allocation3] sm:$0x1] %v591
      %p733 = scmp.eq.s32.totalorder %s25, 1
      // Predicated region
      $region49: #{self_attention_pallas.3} parent=43 // pred_check
        %p734 = pneg %p733
      $region50: #{self_attention_pallas.3} parent=43 // pred_check_branch
        %736 = sbr.rel (%p734) target = $region52
      $region51: #{self_attention_pallas.3} parent=43 // pred_region
        %v737 = vld [vmem:[#allocation5] sm:$0xff]
        %v738 = vld [vmem:[#allocation4] sm:$0x1]
        %v740 = vlaneseq
        %v741 = vshrl.u32 %v740, 7
        %v742 = vsub.s32 0, %v741
        %v743 = vrot.slane %v738, %v742
        %v745 = vrcp.pop %v743
        %v746 = vmul.f32 %v737, %v745
        %s747 = sld [smem:[#allocation6]]
        %v748 = vstv %s747
        %v749 = vmul.f32 %v748, %v746
        %v750 = vld [vmem:[%s328] sm:$0xff]
        %v751 = vadd.f32 %v749, %v750
        %752 = vst [vmem:[%s352] sm:$0xff] %v751
      $region52: #{self_attention_pallas.3} parent=43 // pred_fallthru
        _
      %p753 = scmp.lt.s32.totalorder %s23, 1
      %s754 = scalar_select %p753, %s23, 1
      %p755 = scmp.lt.s32.totalorder %s24, 1
      %s756 = scalar_select %p755, %s24, 1
      %s757 = smul.addr %s754, 2
      %s758 = sadd.s32 %s756, %s757
      %s759 = smul.addr %s758, 8
      %s760 = scalar_lea.vmem %s6, %s759
      // Predicated region
      $region53: #{self_attention_pallas.3} parent=43 // pred_check
        %p761 = pneg %p204
      $region54: #{self_attention_pallas.3} parent=43 // pred_check_branch
        %763 = sbr.rel (%p761) target = $region56
      $region55: #{self_attention_pallas.3} parent=43 // pred_region
        _
      $region56: #{self_attention_pallas.3} parent=43 // pred_fallthru
        _
    $region44: #{self_attention_pallas.3} parent=5 // pred_fallthru
      _
    %p764 = scmp.le.s32.totalorder 2, %s13
    // Predicated region
    $region57: #{self_attention_pallas.3} parent=5 // pred_check
      %p765 = pneg %p764
    $region58: #{self_attention_pallas.3} parent=5 // pred_check_branch
      %767 = sbr.rel (%p765) target = $region60
    $region59: #{self_attention_pallas.3} parent=5 // pred_region
      %s768 = ssub.s32 %s13, 2
      // Predicated region
      $region61: #{self_attention_pallas.3} parent=59 // pred_check
        %p769 = pneg %p210
      $region62: #{self_attention_pallas.3} parent=59 // pred_check_branch
        %771 = sbr.rel (%p769) target = $region64
      $region63: #{self_attention_pallas.3} parent=59 // pred_region
        %p772 = scmp.lt.s32.totalorder %s26, 1
        %s773 = scalar_select %p772, %s26, 1
        %p774 = scmp.lt.s32.totalorder %s27, 1
        %s775 = scalar_select %p774, %s27, 1
        %s776 = smul.addr %s773, 2
        %s777 = sadd.s32 %s775, %s776
        %s778 = smul.addr %s777, 8
        %s779 = scalar_lea.vmem %s6, %s778
      $region64: #{self_attention_pallas.3} parent=59 // pred_fallthru
        _
    $region60: #{self_attention_pallas.3} parent=5 // pred_fallthru
      _
  $region6: #{self_attention_pallas.3} parent=0 // loop_footer
    %s17 = sadd.s32 1, %s13
  $region7: #{self_attention_pallas.3} parent=0 // loop_footer_branch
    %12 = sbr.rel target = $region3
  $region8: #{self_attention_pallas.3} parent=0 // loop_exit
    _

</llo_original>
